<compile_context>
chip_gen: v7x
topology: tpu7x:2x2x1
jax: 0.10.0
libtpu: 0.0.40
codegen_flags: <defaults>
</compile_context>

<pallas_src>
import jax
import jax.numpy as jnp
from jax.experimental import pallas as pl
from jax.experimental.pallas import tpu as pltpu


def _lstm_kernel(x_ref, wih_ref, whh_ref, b_ref, out_ref):
    """Single-invocation, fully unrolled LSTMCell recurrence.

    x_ref:   (B, IN)   input (constant across time, as in the module), matmul dtype
    wih_ref: (IN, 4H)  W_ih^T, torch gate order [i, f, g, o], matmul dtype
    whh_ref: (H, 4H)   W_hh^T, torch gate order [i, f, g, o], matmul dtype
    b_ref:   (1, 4H)   b_ih + b_hh, float32
    out_ref: (B, T*H)  hidden states; step t lives in lanes [t*H, (t+1)*H), float32
    """
    B = x_ref.shape[0]
    four_h = whh_ref.shape[1]
    H = four_h // 4
    T = out_ref.shape[1] // H

    # Loop-invariant input projection + combined bias: computed exactly once.
    xb = (
        jnp.dot(x_ref[...], wih_ref[...], preferred_element_type=jnp.float32)
        + b_ref[...]
    )
    whh = whh_ref[...]
    mm_dtype = whh.dtype

    # hx = cx = 0.01 (matches torch.full(..., 0.01)); carried in vregs.
    h = jnp.full((B, H), 0.01, dtype=jnp.float32)
    c = jnp.full((B, H), 0.01, dtype=jnp.float32)

    # Fully unrolled recurrence (T small & static): one MXU matmul + two full-vreg
    # EUP pushes + the elementwise cell update per step.
    # TODO(synk): switch to lax.fori_loop(..., unroll=4-8) if T grows (bounds vreg
    #   live ranges). The f/o/g lane-group extracts below lower to XLU lane rotates
    #   (free slot, but still on the serial chain); at H a multiple of 128 each gate
    #   would occupy its own vreg and the slices become free.
    for t in range(T):
        gates = xb + jnp.dot(
            h.astype(mm_dtype), whh, preferred_element_type=jnp.float32
        )
        sig = jax.nn.sigmoid(gates)   # full (B, 4H) vreg, unmasked EUP push
        tgh = jnp.tanh(gates)         # full (B, 4H) vreg, unmasked EUP push
        i_g = sig[:, 0 * H:1 * H]
        f_g = sig[:, 1 * H:2 * H]
        g_g = tgh[:, 2 * H:3 * H]
        o_g = sig[:, 3 * H:4 * H]
        c = f_g * c + i_g * g_g
        h = o_g * jnp.tanh(c)
        # Static-slice store into the lane-dense (B, T*H) slab.
        out_ref[:, t * H:(t + 1) * H] = h.astype(out_ref.dtype)


def lstm_regression_forward(x, w_ih, w_hh, b_ih, b_hh, *, time_step=15,
                            matmul_dtype=jnp.bfloat16):
    """Forward of LSTMRegressionModel.

    x: (B, IN); w_ih: (4H, IN); w_hh: (4H, H); b_ih/b_hh: (4H,)  (torch layout).
    Returns the stacked hidden states, shape (time_step, B, H).

    matmul_dtype: dtype of the MXU operands (bf16 by default per the perf review;
    accumulation and all state/elementwise math stay f32). Use jnp.float32 for
    bit-level parity with the f32 reference module.

    NOTE: the input projection is hoisted out of the time loop, which is valid only
    because this module feeds the *same* x at every step.
    """
    x = jnp.asarray(x, jnp.float32)
    w_ih = jnp.asarray(w_ih, jnp.float32)
    w_hh = jnp.asarray(w_hh, jnp.float32)
    b_ih = jnp.asarray(b_ih, jnp.float32)
    b_hh = jnp.asarray(b_hh, jnp.float32)

    B, in_size = x.shape
    four_h, H = w_hh.shape
    assert four_h == 4 * H and w_ih.shape == (four_h, in_size)

    wih_t = w_ih.T.astype(matmul_dtype)                            # (IN, 4H)
    whh_t = w_hh.T.astype(matmul_dtype)                            # (H, 4H)
    bias = (b_ih + b_hh).reshape(1, four_h).astype(jnp.float32)    # (1, 4H)

    vmem = pl.BlockSpec(memory_space=pltpu.MemorySpace.VMEM)
    out_slab = pl.pallas_call(
        _lstm_kernel,
        out_shape=jax.ShapeDtypeStruct((B, time_step * H), jnp.float32),
        in_specs=[vmem, vmem, vmem, vmem],
        out_specs=vmem,
    )(x.astype(matmul_dtype), wih_t, whh_t, bias)

    # (B, T*H) lane-dense slab -> (T, B, H) stacked hidden states.
    return out_slab.reshape(B, time_step, H).transpose(1, 0, 2)


def _reference_forward(x, w_ih, w_hh, b_ih, b_hh, *, time_step=15,
                       matmul_dtype=jnp.float32):
    """Pure-JAX reference of torch.nn.LSTMCell unrolled with constant input x.

    matmul_dtype=jnp.float32  -> faithful f32 reference of the torch module.
    matmul_dtype=jnp.bfloat16 -> matched-precision reference for the bf16 kernel.
    """
    B = x.shape[0]
    H = w_hh.shape[1]
    prec = jax.lax.Precision.HIGHEST
    wih_t = w_ih.T.astype(matmul_dtype)
    whh_t = w_hh.T.astype(matmul_dtype)
    xc = x.astype(matmul_dtype)
    bias = (b_ih + b_hh).reshape(1, 4 * H)
    xb = jnp.dot(xc, wih_t, preferred_element_type=jnp.float32, precision=prec) + bias
    h = jnp.full((B, H), 0.01, jnp.float32)
    c = jnp.full((B, H), 0.01, jnp.float32)
    outs = []
    for _ in range(time_step):
        gates = xb + jnp.dot(h.astype(matmul_dtype), whh_t,
                             preferred_element_type=jnp.float32, precision=prec)
        i_g = jax.nn.sigmoid(gates[:, 0 * H:1 * H])
        f_g = jax.nn.sigmoid(gates[:, 1 * H:2 * H])
        g_g = jnp.tanh(gates[:, 2 * H:3 * H])
        o_g = jax.nn.sigmoid(gates[:, 3 * H:4 * H])
        c = f_g * c + i_g * g_g
        h = o_g * jnp.tanh(c)
        outs.append(h)
    return jnp.stack(outs, axis=0)


if __name__ == "__main__":
    # Small shapes consistent with the module's forward: x is (batch, in_size).
    B, IN, H, T = 8, 32, 32, 15

    key = jax.random.PRNGKey(0)
    kx, k1, k2, k3, k4 = jax.random.split(key, 5)

    # Deterministic params mimicking nn.LSTMCell's uniform(-1/sqrt(H), 1/sqrt(H)).
    bound = 1.0 / (H ** 0.5)
    x = jax.random.normal(kx, (B, IN), jnp.float32)
    w_ih = jax.random.uniform(k1, (4 * H, IN), jnp.float32, -bound, bound)
    w_hh = jax.random.uniform(k2, (4 * H, H), jnp.float32, -bound, bound)
    b_ih = jax.random.uniform(k3, (4 * H,), jnp.float32, -bound, bound)
    b_hh = jax.random.uniform(k4, (4 * H,), jnp.float32, -bound, bound)

    out = lstm_regression_forward(x, w_ih, w_hh, b_ih, b_hh, time_step=T)
    out = jax.block_until_ready(out)
    assert out.shape == (T, B, H)

    # (a) Tight check against a matched-precision (bf16-operand) JAX reference.
    ref_bf16 = _reference_forward(x, w_ih, w_hh, b_ih, b_hh, time_step=T,
                                  matmul_dtype=jnp.bfloat16)
    assert jnp.allclose(out, ref_bf16, atol=2e-3, rtol=2e-3), \
        "mismatch vs matched-precision reference"

    # (b) Sanity bound against the full-f32 reference: bf16 MXU operands trade a
    #     small amount of accuracy for ~3x lower per-step MXU latency; pass
    #     matmul_dtype=jnp.float32 to the wrapper when bit-level parity is needed.
    ref_f32 = _reference_forward(x, w_ih, w_hh, b_ih, b_hh, time_step=T,
                                 matmul_dtype=jnp.float32)
    assert jnp.allclose(out, ref_f32, atol=7.5e-2, rtol=0.0), \
        "mismatch vs f32 reference"

    # TODO(synk): the reference module's `torch.from_numpy(out_list)` is a bug
    # (out_list is a list of CUDA tensors); we return the intended stacked hidden
    # states of shape (time_step, B, H) instead.
    print("KERNEL_OK")
</pallas_src>

<mosaic_0001>
module attributes {stable_mosaic.version = 11 : i64} {
  func.func @_lstm_kernel(%arg0: memref<8x32xbf16, #tpu.memory_space<vmem>>, %arg1: memref<32x128xbf16, #tpu.memory_space<vmem>>, %arg2: memref<32x128xbf16, #tpu.memory_space<vmem>>, %arg3: memref<1x128xf32, #tpu.memory_space<vmem>>, %arg4: memref<8x480xf32, #tpu.memory_space<vmem>>) attributes {dimension_semantics = [], scalar_prefetch = 0 : i64, scratch_operands = 0 : i64, tpu.core_type = #tpu.core_type<tc>} {
    %c0 = arith.constant 0 : index
    %c0_0 = arith.constant 0 : index
    %0 = vector.load %arg0[%c0, %c0_0] : memref<8x32xbf16, #tpu.memory_space<vmem>>, vector<8x32xbf16>
    %c0_1 = arith.constant 0 : index
    %c0_2 = arith.constant 0 : index
    %1 = vector.load %arg1[%c0_1, %c0_2] : memref<32x128xbf16, #tpu.memory_space<vmem>>, vector<32x128xbf16>
    %cst = arith.constant dense<0.000000e+00> : vector<8x128xf32>
    %2 = tpu.matmul %0, %1, %cst {dimension_numbers = #tpu.dot_dimension_numbers<[1], [0], [0], [1], [0, 0, 1, 1], [], []>} : vector<8x32xbf16>, vector<32x128xbf16>, vector<8x128xf32> -> vector<8x128xf32>
    %c0_3 = arith.constant 0 : index
    %c0_4 = arith.constant 0 : index
    %3 = vector.load %arg3[%c0_3, %c0_4] : memref<1x128xf32, #tpu.memory_space<vmem>>, vector<1x128xf32>
    %4 = vector.broadcast %3 : vector<1x128xf32> to vector<8x128xf32>
    %5 = arith.addf %2, %4 : vector<8x128xf32>
    %c0_5 = arith.constant 0 : index
    %c0_6 = arith.constant 0 : index
    %6 = vector.load %arg2[%c0_5, %c0_6] : memref<32x128xbf16, #tpu.memory_space<vmem>>, vector<32x128xbf16>
    %cst_7 = arith.constant 0.00999999977 : f32
    %7 = vector.broadcast %cst_7 : f32 to vector<8x32xf32>
    %cst_8 = arith.constant 0.00999999977 : f32
    %8 = vector.broadcast %cst_8 : f32 to vector<8x32xf32>
    %9 = arith.truncf %7 : vector<8x32xf32> to vector<8x32xbf16>
    %cst_9 = arith.constant dense<0.000000e+00> : vector<8x128xf32>
    %10 = tpu.matmul %9, %6, %cst_9 {dimension_numbers = #tpu.dot_dimension_numbers<[1], [0], [0], [1], [0, 0, 1, 1], [], []>} : vector<8x32xbf16>, vector<32x128xbf16>, vector<8x128xf32> -> vector<8x128xf32>
    %11 = arith.addf %5, %10 : vector<8x128xf32>
    %12 = arith.negf %11 : vector<8x128xf32>
    %13 = math.exp %12 : vector<8x128xf32>
    %cst_10 = arith.constant 1.000000e+00 : f32
    %14 = vector.broadcast %cst_10 : f32 to vector<8x128xf32>
    %15 = arith.addf %14, %13 : vector<8x128xf32>
    %16 = arith.divf %14, %15 : vector<8x128xf32>
    %17 = math.tanh %11 : vector<8x128xf32>
    %18 = vector.extract_strided_slice %16 {offsets = [0, 0], sizes = [8, 32], strides = [1, 1]} : vector<8x128xf32> to vector<8x32xf32>
    %19 = vector.extract_strided_slice %16 {offsets = [0, 32], sizes = [8, 32], strides = [1, 1]} : vector<8x128xf32> to vector<8x32xf32>
    %20 = vector.extract_strided_slice %17 {offsets = [0, 64], sizes = [8, 32], strides = [1, 1]} : vector<8x128xf32> to vector<8x32xf32>
    %21 = vector.extract_strided_slice %16 {offsets = [0, 96], sizes = [8, 32], strides = [1, 1]} : vector<8x128xf32> to vector<8x32xf32>
    %22 = arith.mulf %19, %8 : vector<8x32xf32>
    %23 = arith.mulf %18, %20 : vector<8x32xf32>
    %24 = arith.addf %22, %23 : vector<8x32xf32>
    %25 = math.tanh %24 : vector<8x32xf32>
    %26 = arith.mulf %21, %25 : vector<8x32xf32>
    %c0_11 = arith.constant 0 : index
    %c0_12 = arith.constant 0 : index
    %27 = vector.load %arg4[%c0_11, %c0_12] : memref<8x480xf32, #tpu.memory_space<vmem>>, vector<8x32xf32>
    tpu.vector_store %arg4[%c0_11, %c0_12], %26 {strides = array<i32>} : memref<8x480xf32, #tpu.memory_space<vmem>>, vector<8x32xf32>,
    %28 = arith.truncf %26 : vector<8x32xf32> to vector<8x32xbf16>
    %cst_13 = arith.constant dense<0.000000e+00> : vector<8x128xf32>
    %29 = tpu.matmul %28, %6, %cst_13 {dimension_numbers = #tpu.dot_dimension_numbers<[1], [0], [0], [1], [0, 0, 1, 1], [], []>} : vector<8x32xbf16>, vector<32x128xbf16>, vector<8x128xf32> -> vector<8x128xf32>
    %30 = arith.addf %5, %29 : vector<8x128xf32>
    %31 = arith.negf %30 : vector<8x128xf32>
    %32 = math.exp %31 : vector<8x128xf32>
    %cst_14 = arith.constant 1.000000e+00 : f32
    %33 = vector.broadcast %cst_14 : f32 to vector<8x128xf32>
    %34 = arith.addf %33, %32 : vector<8x128xf32>
    %35 = arith.divf %33, %34 : vector<8x128xf32>
    %36 = math.tanh %30 : vector<8x128xf32>
    %37 = vector.extract_strided_slice %35 {offsets = [0, 0], sizes = [8, 32], strides = [1, 1]} : vector<8x128xf32> to vector<8x32xf32>
    %38 = vector.extract_strided_slice %35 {offsets = [0, 32], sizes = [8, 32], strides = [1, 1]} : vector<8x128xf32> to vector<8x32xf32>
    %39 = vector.extract_strided_slice %36 {offsets = [0, 64], sizes = [8, 32], strides = [1, 1]} : vector<8x128xf32> to vector<8x32xf32>
    %40 = vector.extract_strided_slice %35 {offsets = [0, 96], sizes = [8, 32], strides = [1, 1]} : vector<8x128xf32> to vector<8x32xf32>
    %41 = arith.mulf %38, %24 : vector<8x32xf32>
    %42 = arith.mulf %37, %39 : vector<8x32xf32>
    %43 = arith.addf %41, %42 : vector<8x32xf32>
    %44 = math.tanh %43 : vector<8x32xf32>
    %45 = arith.mulf %40, %44 : vector<8x32xf32>
    %c0_15 = arith.constant 0 : index
    %c32 = arith.constant 32 : index
    %46 = vector.load %arg4[%c0_15, %c32] : memref<8x480xf32, #tpu.memory_space<vmem>>, vector<8x32xf32>
    tpu.vector_store %arg4[%c0_15, %c32], %45 {strides = array<i32>} : memref<8x480xf32, #tpu.memory_space<vmem>>, vector<8x32xf32>,
    %47 = arith.truncf %45 : vector<8x32xf32> to vector<8x32xbf16>
    %cst_16 = arith.constant dense<0.000000e+00> : vector<8x128xf32>
    %48 = tpu.matmul %47, %6, %cst_16 {dimension_numbers = #tpu.dot_dimension_numbers<[1], [0], [0], [1], [0, 0, 1, 1], [], []>} : vector<8x32xbf16>, vector<32x128xbf16>, vector<8x128xf32> -> vector<8x128xf32>
    %49 = arith.addf %5, %48 : vector<8x128xf32>
    %50 = arith.negf %49 : vector<8x128xf32>
    %51 = math.exp %50 : vector<8x128xf32>
    %cst_17 = arith.constant 1.000000e+00 : f32
    %52 = vector.broadcast %cst_17 : f32 to vector<8x128xf32>
    %53 = arith.addf %52, %51 : vector<8x128xf32>
    %54 = arith.divf %52, %53 : vector<8x128xf32>
    %55 = math.tanh %49 : vector<8x128xf32>
    %56 = vector.extract_strided_slice %54 {offsets = [0, 0], sizes = [8, 32], strides = [1, 1]} : vector<8x128xf32> to vector<8x32xf32>
    %57 = vector.extract_strided_slice %54 {offsets = [0, 32], sizes = [8, 32], strides = [1, 1]} : vector<8x128xf32> to vector<8x32xf32>
    %58 = vector.extract_strided_slice %55 {offsets = [0, 64], sizes = [8, 32], strides = [1, 1]} : vector<8x128xf32> to vector<8x32xf32>
    %59 = vector.extract_strided_slice %54 {offsets = [0, 96], sizes = [8, 32], strides = [1, 1]} : vector<8x128xf32> to vector<8x32xf32>
    %60 = arith.mulf %57, %43 : vector<8x32xf32>
    %61 = arith.mulf %56, %58 : vector<8x32xf32>
    %62 = arith.addf %60, %61 : vector<8x32xf32>
    %63 = math.tanh %62 : vector<8x32xf32>
    %64 = arith.mulf %59, %63 : vector<8x32xf32>
    %c0_18 = arith.constant 0 : index
    %c64 = arith.constant 64 : index
    %65 = vector.load %arg4[%c0_18, %c64] : memref<8x480xf32, #tpu.memory_space<vmem>>, vector<8x32xf32>
    tpu.vector_store %arg4[%c0_18, %c64], %64 {strides = array<i32>} : memref<8x480xf32, #tpu.memory_space<vmem>>, vector<8x32xf32>,
    %66 = arith.truncf %64 : vector<8x32xf32> to vector<8x32xbf16>
    %cst_19 = arith.constant dense<0.000000e+00> : vector<8x128xf32>
    %67 = tpu.matmul %66, %6, %cst_19 {dimension_numbers = #tpu.dot_dimension_numbers<[1], [0], [0], [1], [0, 0, 1, 1], [], []>} : vector<8x32xbf16>, vector<32x128xbf16>, vector<8x128xf32> -> vector<8x128xf32>
    %68 = arith.addf %5, %67 : vector<8x128xf32>
    %69 = arith.negf %68 : vector<8x128xf32>
    %70 = math.exp %69 : vector<8x128xf32>
    %cst_20 = arith.constant 1.000000e+00 : f32
    %71 = vector.broadcast %cst_20 : f32 to vector<8x128xf32>
    %72 = arith.addf %71, %70 : vector<8x128xf32>
    %73 = arith.divf %71, %72 : vector<8x128xf32>
    %74 = math.tanh %68 : vector<8x128xf32>
    %75 = vector.extract_strided_slice %73 {offsets = [0, 0], sizes = [8, 32], strides = [1, 1]} : vector<8x128xf32> to vector<8x32xf32>
    %76 = vector.extract_strided_slice %73 {offsets = [0, 32], sizes = [8, 32], strides = [1, 1]} : vector<8x128xf32> to vector<8x32xf32>
    %77 = vector.extract_strided_slice %74 {offsets = [0, 64], sizes = [8, 32], strides = [1, 1]} : vector<8x128xf32> to vector<8x32xf32>
    %78 = vector.extract_strided_slice %73 {offsets = [0, 96], sizes = [8, 32], strides = [1, 1]} : vector<8x128xf32> to vector<8x32xf32>
    %79 = arith.mulf %76, %62 : vector<8x32xf32>
    %80 = arith.mulf %75, %77 : vector<8x32xf32>
    %81 = arith.addf %79, %80 : vector<8x32xf32>
    %82 = math.tanh %81 : vector<8x32xf32>
    %83 = arith.mulf %78, %82 : vector<8x32xf32>
    %c0_21 = arith.constant 0 : index
    %c96 = arith.constant 96 : index
    %84 = vector.load %arg4[%c0_21, %c96] : memref<8x480xf32, #tpu.memory_space<vmem>>, vector<8x32xf32>
    tpu.vector_store %arg4[%c0_21, %c96], %83 {strides = array<i32>} : memref<8x480xf32, #tpu.memory_space<vmem>>, vector<8x32xf32>,
    %85 = arith.truncf %83 : vector<8x32xf32> to vector<8x32xbf16>
    %cst_22 = arith.constant dense<0.000000e+00> : vector<8x128xf32>
    %86 = tpu.matmul %85, %6, %cst_22 {dimension_numbers = #tpu.dot_dimension_numbers<[1], [0], [0], [1], [0, 0, 1, 1], [], []>} : vector<8x32xbf16>, vector<32x128xbf16>, vector<8x128xf32> -> vector<8x128xf32>
    %87 = arith.addf %5, %86 : vector<8x128xf32>
    %88 = arith.negf %87 : vector<8x128xf32>
    %89 = math.exp %88 : vector<8x128xf32>
    %cst_23 = arith.constant 1.000000e+00 : f32
    %90 = vector.broadcast %cst_23 : f32 to vector<8x128xf32>
    %91 = arith.addf %90, %89 : vector<8x128xf32>
    %92 = arith.divf %90, %91 : vector<8x128xf32>
    %93 = math.tanh %87 : vector<8x128xf32>
    %94 = vector.extract_strided_slice %92 {offsets = [0, 0], sizes = [8, 32], strides = [1, 1]} : vector<8x128xf32> to vector<8x32xf32>
    %95 = vector.extract_strided_slice %92 {offsets = [0, 32], sizes = [8, 32], strides = [1, 1]} : vector<8x128xf32> to vector<8x32xf32>
    %96 = vector.extract_strided_slice %93 {offsets = [0, 64], sizes = [8, 32], strides = [1, 1]} : vector<8x128xf32> to vector<8x32xf32>
    %97 = vector.extract_strided_slice %92 {offsets = [0, 96], sizes = [8, 32], strides = [1, 1]} : vector<8x128xf32> to vector<8x32xf32>
    %98 = arith.mulf %95, %81 : vector<8x32xf32>
    %99 = arith.mulf %94, %96 : vector<8x32xf32>
    %100 = arith.addf %98, %99 : vector<8x32xf32>
    %101 = math.tanh %100 : vector<8x32xf32>
    %102 = arith.mulf %97, %101 : vector<8x32xf32>
    %c0_24 = arith.constant 0 : index
    %c128 = arith.constant 128 : index
    %103 = vector.load %arg4[%c0_24, %c128] : memref<8x480xf32, #tpu.memory_space<vmem>>, vector<8x32xf32>
    tpu.vector_store %arg4[%c0_24, %c128], %102 {strides = array<i32>} : memref<8x480xf32, #tpu.memory_space<vmem>>, vector<8x32xf32>,
    %104 = arith.truncf %102 : vector<8x32xf32> to vector<8x32xbf16>
    %cst_25 = arith.constant dense<0.000000e+00> : vector<8x128xf32>
    %105 = tpu.matmul %104, %6, %cst_25 {dimension_numbers = #tpu.dot_dimension_numbers<[1], [0], [0], [1], [0, 0, 1, 1], [], []>} : vector<8x32xbf16>, vector<32x128xbf16>, vector<8x128xf32> -> vector<8x128xf32>
    %106 = arith.addf %5, %105 : vector<8x128xf32>
    %107 = arith.negf %106 : vector<8x128xf32>
    %108 = math.exp %107 : vector<8x128xf32>
    %cst_26 = arith.constant 1.000000e+00 : f32
    %109 = vector.broadcast %cst_26 : f32 to vector<8x128xf32>
    %110 = arith.addf %109, %108 : vector<8x128xf32>
    %111 = arith.divf %109, %110 : vector<8x128xf32>
    %112 = math.tanh %106 : vector<8x128xf32>
    %113 = vector.extract_strided_slice %111 {offsets = [0, 0], sizes = [8, 32], strides = [1, 1]} : vector<8x128xf32> to vector<8x32xf32>
    %114 = vector.extract_strided_slice %111 {offsets = [0, 32], sizes = [8, 32], strides = [1, 1]} : vector<8x128xf32> to vector<8x32xf32>
    %115 = vector.extract_strided_slice %112 {offsets = [0, 64], sizes = [8, 32], strides = [1, 1]} : vector<8x128xf32> to vector<8x32xf32>
    %116 = vector.extract_strided_slice %111 {offsets = [0, 96], sizes = [8, 32], strides = [1, 1]} : vector<8x128xf32> to vector<8x32xf32>
    %117 = arith.mulf %114, %100 : vector<8x32xf32>
    %118 = arith.mulf %113, %115 : vector<8x32xf32>
    %119 = arith.addf %117, %118 : vector<8x32xf32>
    %120 = math.tanh %119 : vector<8x32xf32>
    %121 = arith.mulf %116, %120 : vector<8x32xf32>
    %c0_27 = arith.constant 0 : index
    %c160 = arith.constant 160 : index
    %122 = vector.load %arg4[%c0_27, %c160] : memref<8x480xf32, #tpu.memory_space<vmem>>, vector<8x32xf32>
    tpu.vector_store %arg4[%c0_27, %c160], %121 {strides = array<i32>} : memref<8x480xf32, #tpu.memory_space<vmem>>, vector<8x32xf32>,
    %123 = arith.truncf %121 : vector<8x32xf32> to vector<8x32xbf16>
    %cst_28 = arith.constant dense<0.000000e+00> : vector<8x128xf32>
    %124 = tpu.matmul %123, %6, %cst_28 {dimension_numbers = #tpu.dot_dimension_numbers<[1], [0], [0], [1], [0, 0, 1, 1], [], []>} : vector<8x32xbf16>, vector<32x128xbf16>, vector<8x128xf32> -> vector<8x128xf32>
    %125 = arith.addf %5, %124 : vector<8x128xf32>
    %126 = arith.negf %125 : vector<8x128xf32>
    %127 = math.exp %126 : vector<8x128xf32>
    %cst_29 = arith.constant 1.000000e+00 : f32
    %128 = vector.broadcast %cst_29 : f32 to vector<8x128xf32>
    %129 = arith.addf %128, %127 : vector<8x128xf32>
    %130 = arith.divf %128, %129 : vector<8x128xf32>
    %131 = math.tanh %125 : vector<8x128xf32>
    %132 = vector.extract_strided_slice %130 {offsets = [0, 0], sizes = [8, 32], strides = [1, 1]} : vector<8x128xf32> to vector<8x32xf32>
    %133 = vector.extract_strided_slice %130 {offsets = [0, 32], sizes = [8, 32], strides = [1, 1]} : vector<8x128xf32> to vector<8x32xf32>
    %134 = vector.extract_strided_slice %131 {offsets = [0, 64], sizes = [8, 32], strides = [1, 1]} : vector<8x128xf32> to vector<8x32xf32>
    %135 = vector.extract_strided_slice %130 {offsets = [0, 96], sizes = [8, 32], strides = [1, 1]} : vector<8x128xf32> to vector<8x32xf32>
    %136 = arith.mulf %133, %119 : vector<8x32xf32>
    %137 = arith.mulf %132, %134 : vector<8x32xf32>
    %138 = arith.addf %136, %137 : vector<8x32xf32>
    %139 = math.tanh %138 : vector<8x32xf32>
    %140 = arith.mulf %135, %139 : vector<8x32xf32>
    %c0_30 = arith.constant 0 : index
    %c192 = arith.constant 192 : index
    %141 = vector.load %arg4[%c0_30, %c192] : memref<8x480xf32, #tpu.memory_space<vmem>>, vector<8x32xf32>
    tpu.vector_store %arg4[%c0_30, %c192], %140 {strides = array<i32>} : memref<8x480xf32, #tpu.memory_space<vmem>>, vector<8x32xf32>,
    %142 = arith.truncf %140 : vector<8x32xf32> to vector<8x32xbf16>
    %cst_31 = arith.constant dense<0.000000e+00> : vector<8x128xf32>
    %143 = tpu.matmul %142, %6, %cst_31 {dimension_numbers = #tpu.dot_dimension_numbers<[1], [0], [0], [1], [0, 0, 1, 1], [], []>} : vector<8x32xbf16>, vector<32x128xbf16>, vector<8x128xf32> -> vector<8x128xf32>
    %144 = arith.addf %5, %143 : vector<8x128xf32>
    %145 = arith.negf %144 : vector<8x128xf32>
    %146 = math.exp %145 : vector<8x128xf32>
    %cst_32 = arith.constant 1.000000e+00 : f32
    %147 = vector.broadcast %cst_32 : f32 to vector<8x128xf32>
    %148 = arith.addf %147, %146 : vector<8x128xf32>
    %149 = arith.divf %147, %148 : vector<8x128xf32>
    %150 = math.tanh %144 : vector<8x128xf32>
    %151 = vector.extract_strided_slice %149 {offsets = [0, 0], sizes = [8, 32], strides = [1, 1]} : vector<8x128xf32> to vector<8x32xf32>
    %152 = vector.extract_strided_slice %149 {offsets = [0, 32], sizes = [8, 32], strides = [1, 1]} : vector<8x128xf32> to vector<8x32xf32>
    %153 = vector.extract_strided_slice %150 {offsets = [0, 64], sizes = [8, 32], strides = [1, 1]} : vector<8x128xf32> to vector<8x32xf32>
    %154 = vector.extract_strided_slice %149 {offsets = [0, 96], sizes = [8, 32], strides = [1, 1]} : vector<8x128xf32> to vector<8x32xf32>
    %155 = arith.mulf %152, %138 : vector<8x32xf32>
    %156 = arith.mulf %151, %153 : vector<8x32xf32>
    %157 = arith.addf %155, %156 : vector<8x32xf32>
    %158 = math.tanh %157 : vector<8x32xf32>
    %159 = arith.mulf %154, %158 : vector<8x32xf32>
    %c0_33 = arith.constant 0 : index
    %c224 = arith.constant 224 : index
    %160 = vector.load %arg4[%c0_33, %c224] : memref<8x480xf32, #tpu.memory_space<vmem>>, vector<8x32xf32>
    tpu.vector_store %arg4[%c0_33, %c224], %159 {strides = array<i32>} : memref<8x480xf32, #tpu.memory_space<vmem>>, vector<8x32xf32>,
    %161 = arith.truncf %159 : vector<8x32xf32> to vector<8x32xbf16>
    %cst_34 = arith.constant dense<0.000000e+00> : vector<8x128xf32>
    %162 = tpu.matmul %161, %6, %cst_34 {dimension_numbers = #tpu.dot_dimension_numbers<[1], [0], [0], [1], [0, 0, 1, 1], [], []>} : vector<8x32xbf16>, vector<32x128xbf16>, vector<8x128xf32> -> vector<8x128xf32>
    %163 = arith.addf %5, %162 : vector<8x128xf32>
    %164 = arith.negf %163 : vector<8x128xf32>
    %165 = math.exp %164 : vector<8x128xf32>
    %cst_35 = arith.constant 1.000000e+00 : f32
    %166 = vector.broadcast %cst_35 : f32 to vector<8x128xf32>
    %167 = arith.addf %166, %165 : vector<8x128xf32>
    %168 = arith.divf %166, %167 : vector<8x128xf32>
    %169 = math.tanh %163 : vector<8x128xf32>
    %170 = vector.extract_strided_slice %168 {offsets = [0, 0], sizes = [8, 32], strides = [1, 1]} : vector<8x128xf32> to vector<8x32xf32>
    %171 = vector.extract_strided_slice %168 {offsets = [0, 32], sizes = [8, 32], strides = [1, 1]} : vector<8x128xf32> to vector<8x32xf32>
    %172 = vector.extract_strided_slice %169 {offsets = [0, 64], sizes = [8, 32], strides = [1, 1]} : vector<8x128xf32> to vector<8x32xf32>
    %173 = vector.extract_strided_slice %168 {offsets = [0, 96], sizes = [8, 32], strides = [1, 1]} : vector<8x128xf32> to vector<8x32xf32>
    %174 = arith.mulf %171, %157 : vector<8x32xf32>
    %175 = arith.mulf %170, %172 : vector<8x32xf32>
    %176 = arith.addf %174, %175 : vector<8x32xf32>
    %177 = math.tanh %176 : vector<8x32xf32>
    %178 = arith.mulf %173, %177 : vector<8x32xf32>
    %c0_36 = arith.constant 0 : index
    %c256 = arith.constant 256 : index
    %179 = vector.load %arg4[%c0_36, %c256] : memref<8x480xf32, #tpu.memory_space<vmem>>, vector<8x32xf32>
    tpu.vector_store %arg4[%c0_36, %c256], %178 {strides = array<i32>} : memref<8x480xf32, #tpu.memory_space<vmem>>, vector<8x32xf32>,
    %180 = arith.truncf %178 : vector<8x32xf32> to vector<8x32xbf16>
    %cst_37 = arith.constant dense<0.000000e+00> : vector<8x128xf32>
    %181 = tpu.matmul %180, %6, %cst_37 {dimension_numbers = #tpu.dot_dimension_numbers<[1], [0], [0], [1], [0, 0, 1, 1], [], []>} : vector<8x32xbf16>, vector<32x128xbf16>, vector<8x128xf32> -> vector<8x128xf32>
    %182 = arith.addf %5, %181 : vector<8x128xf32>
    %183 = arith.negf %182 : vector<8x128xf32>
    %184 = math.exp %183 : vector<8x128xf32>
    %cst_38 = arith.constant 1.000000e+00 : f32
    %185 = vector.broadcast %cst_38 : f32 to vector<8x128xf32>
    %186 = arith.addf %185, %184 : vector<8x128xf32>
    %187 = arith.divf %185, %186 : vector<8x128xf32>
    %188 = math.tanh %182 : vector<8x128xf32>
    %189 = vector.extract_strided_slice %187 {offsets = [0, 0], sizes = [8, 32], strides = [1, 1]} : vector<8x128xf32> to vector<8x32xf32>
    %190 = vector.extract_strided_slice %187 {offsets = [0, 32], sizes = [8, 32], strides = [1, 1]} : vector<8x128xf32> to vector<8x32xf32>
    %191 = vector.extract_strided_slice %188 {offsets = [0, 64], sizes = [8, 32], strides = [1, 1]} : vector<8x128xf32> to vector<8x32xf32>
    %192 = vector.extract_strided_slice %187 {offsets = [0, 96], sizes = [8, 32], strides = [1, 1]} : vector<8x128xf32> to vector<8x32xf32>
    %193 = arith.mulf %190, %176 : vector<8x32xf32>
    %194 = arith.mulf %189, %191 : vector<8x32xf32>
    %195 = arith.addf %193, %194 : vector<8x32xf32>
    %196 = math.tanh %195 : vector<8x32xf32>
    %197 = arith.mulf %192, %196 : vector<8x32xf32>
    %c0_39 = arith.constant 0 : index
    %c288 = arith.constant 288 : index
    %198 = vector.load %arg4[%c0_39, %c288] : memref<8x480xf32, #tpu.memory_space<vmem>>, vector<8x32xf32>
    tpu.vector_store %arg4[%c0_39, %c288], %197 {strides = array<i32>} : memref<8x480xf32, #tpu.memory_space<vmem>>, vector<8x32xf32>,
    %199 = arith.truncf %197 : vector<8x32xf32> to vector<8x32xbf16>
    %cst_40 = arith.constant dense<0.000000e+00> : vector<8x128xf32>
    %200 = tpu.matmul %199, %6, %cst_40 {dimension_numbers = #tpu.dot_dimension_numbers<[1], [0], [0], [1], [0, 0, 1, 1], [], []>} : vector<8x32xbf16>, vector<32x128xbf16>, vector<8x128xf32> -> vector<8x128xf32>
    %201 = arith.addf %5, %200 : vector<8x128xf32>
    %202 = arith.negf %201 : vector<8x128xf32>
    %203 = math.exp %202 : vector<8x128xf32>
    %cst_41 = arith.constant 1.000000e+00 : f32
    %204 = vector.broadcast %cst_41 : f32 to vector<8x128xf32>
    %205 = arith.addf %204, %203 : vector<8x128xf32>
    %206 = arith.divf %204, %205 : vector<8x128xf32>
    %207 = math.tanh %201 : vector<8x128xf32>
    %208 = vector.extract_strided_slice %206 {offsets = [0, 0], sizes = [8, 32], strides = [1, 1]} : vector<8x128xf32> to vector<8x32xf32>
    %209 = vector.extract_strided_slice %206 {offsets = [0, 32], sizes = [8, 32], strides = [1, 1]} : vector<8x128xf32> to vector<8x32xf32>
    %210 = vector.extract_strided_slice %207 {offsets = [0, 64], sizes = [8, 32], strides = [1, 1]} : vector<8x128xf32> to vector<8x32xf32>
    %211 = vector.extract_strided_slice %206 {offsets = [0, 96], sizes = [8, 32], strides = [1, 1]} : vector<8x128xf32> to vector<8x32xf32>
    %212 = arith.mulf %209, %195 : vector<8x32xf32>
    %213 = arith.mulf %208, %210 : vector<8x32xf32>
    %214 = arith.addf %212, %213 : vector<8x32xf32>
    %215 = math.tanh %214 : vector<8x32xf32>
    %216 = arith.mulf %211, %215 : vector<8x32xf32>
    %c0_42 = arith.constant 0 : index
    %c320 = arith.constant 320 : index
    %217 = vector.load %arg4[%c0_42, %c320] : memref<8x480xf32, #tpu.memory_space<vmem>>, vector<8x32xf32>
    tpu.vector_store %arg4[%c0_42, %c320], %216 {strides = array<i32>} : memref<8x480xf32, #tpu.memory_space<vmem>>, vector<8x32xf32>,
    %218 = arith.truncf %216 : vector<8x32xf32> to vector<8x32xbf16>
    %cst_43 = arith.constant dense<0.000000e+00> : vector<8x128xf32>
    %219 = tpu.matmul %218, %6, %cst_43 {dimension_numbers = #tpu.dot_dimension_numbers<[1], [0], [0], [1], [0, 0, 1, 1], [], []>} : vector<8x32xbf16>, vector<32x128xbf16>, vector<8x128xf32> -> vector<8x128xf32>
    %220 = arith.addf %5, %219 : vector<8x128xf32>
    %221 = arith.negf %220 : vector<8x128xf32>
    %222 = math.exp %221 : vector<8x128xf32>
    %cst_44 = arith.constant 1.000000e+00 : f32
    %223 = vector.broadcast %cst_44 : f32 to vector<8x128xf32>
    %224 = arith.addf %223, %222 : vector<8x128xf32>
    %225 = arith.divf %223, %224 : vector<8x128xf32>
    %226 = math.tanh %220 : vector<8x128xf32>
    %227 = vector.extract_strided_slice %225 {offsets = [0, 0], sizes = [8, 32], strides = [1, 1]} : vector<8x128xf32> to vector<8x32xf32>
    %228 = vector.extract_strided_slice %225 {offsets = [0, 32], sizes = [8, 32], strides = [1, 1]} : vector<8x128xf32> to vector<8x32xf32>
    %229 = vector.extract_strided_slice %226 {offsets = [0, 64], sizes = [8, 32], strides = [1, 1]} : vector<8x128xf32> to vector<8x32xf32>
    %230 = vector.extract_strided_slice %225 {offsets = [0, 96], sizes = [8, 32], strides = [1, 1]} : vector<8x128xf32> to vector<8x32xf32>
    %231 = arith.mulf %228, %214 : vector<8x32xf32>
    %232 = arith.mulf %227, %229 : vector<8x32xf32>
    %233 = arith.addf %231, %232 : vector<8x32xf32>
    %234 = math.tanh %233 : vector<8x32xf32>
    %235 = arith.mulf %230, %234 : vector<8x32xf32>
    %c0_45 = arith.constant 0 : index
    %c352 = arith.constant 352 : index
    %236 = vector.load %arg4[%c0_45, %c352] : memref<8x480xf32, #tpu.memory_space<vmem>>, vector<8x32xf32>
    tpu.vector_store %arg4[%c0_45, %c352], %235 {strides = array<i32>} : memref<8x480xf32, #tpu.memory_space<vmem>>, vector<8x32xf32>,
    %237 = arith.truncf %235 : vector<8x32xf32> to vector<8x32xbf16>
    %cst_46 = arith.constant dense<0.000000e+00> : vector<8x128xf32>
    %238 = tpu.matmul %237, %6, %cst_46 {dimension_numbers = #tpu.dot_dimension_numbers<[1], [0], [0], [1], [0, 0, 1, 1], [], []>} : vector<8x32xbf16>, vector<32x128xbf16>, vector<8x128xf32> -> vector<8x128xf32>
    %239 = arith.addf %5, %238 : vector<8x128xf32>
    %240 = arith.negf %239 : vector<8x128xf32>
    %241 = math.exp %240 : vector<8x128xf32>
    %cst_47 = arith.constant 1.000000e+00 : f32
    %242 = vector.broadcast %cst_47 : f32 to vector<8x128xf32>
    %243 = arith.addf %242, %241 : vector<8x128xf32>
    %244 = arith.divf %242, %243 : vector<8x128xf32>
    %245 = math.tanh %239 : vector<8x128xf32>
    %246 = vector.extract_strided_slice %244 {offsets = [0, 0], sizes = [8, 32], strides = [1, 1]} : vector<8x128xf32> to vector<8x32xf32>
    %247 = vector.extract_strided_slice %244 {offsets = [0, 32], sizes = [8, 32], strides = [1, 1]} : vector<8x128xf32> to vector<8x32xf32>
    %248 = vector.extract_strided_slice %245 {offsets = [0, 64], sizes = [8, 32], strides = [1, 1]} : vector<8x128xf32> to vector<8x32xf32>
    %249 = vector.extract_strided_slice %244 {offsets = [0, 96], sizes = [8, 32], strides = [1, 1]} : vector<8x128xf32> to vector<8x32xf32>
    %250 = arith.mulf %247, %233 : vector<8x32xf32>
    %251 = arith.mulf %246, %248 : vector<8x32xf32>
    %252 = arith.addf %250, %251 : vector<8x32xf32>
    %253 = math.tanh %252 : vector<8x32xf32>
    %254 = arith.mulf %249, %253 : vector<8x32xf32>
    %c0_48 = arith.constant 0 : index
    %c384 = arith.constant 384 : index
    %255 = vector.load %arg4[%c0_48, %c384] : memref<8x480xf32, #tpu.memory_space<vmem>>, vector<8x32xf32>
    tpu.vector_store %arg4[%c0_48, %c384], %254 {strides = array<i32>} : memref<8x480xf32, #tpu.memory_space<vmem>>, vector<8x32xf32>,
    %256 = arith.truncf %254 : vector<8x32xf32> to vector<8x32xbf16>
    %cst_49 = arith.constant dense<0.000000e+00> : vector<8x128xf32>
    %257 = tpu.matmul %256, %6, %cst_49 {dimension_numbers = #tpu.dot_dimension_numbers<[1], [0], [0], [1], [0, 0, 1, 1], [], []>} : vector<8x32xbf16>, vector<32x128xbf16>, vector<8x128xf32> -> vector<8x128xf32>
    %258 = arith.addf %5, %257 : vector<8x128xf32>
    %259 = arith.negf %258 : vector<8x128xf32>
    %260 = math.exp %259 : vector<8x128xf32>
    %cst_50 = arith.constant 1.000000e+00 : f32
    %261 = vector.broadcast %cst_50 : f32 to vector<8x128xf32>
    %262 = arith.addf %261, %260 : vector<8x128xf32>
    %263 = arith.divf %261, %262 : vector<8x128xf32>
    %264 = math.tanh %258 : vector<8x128xf32>
    %265 = vector.extract_strided_slice %263 {offsets = [0, 0], sizes = [8, 32], strides = [1, 1]} : vector<8x128xf32> to vector<8x32xf32>
    %266 = vector.extract_strided_slice %263 {offsets = [0, 32], sizes = [8, 32], strides = [1, 1]} : vector<8x128xf32> to vector<8x32xf32>
    %267 = vector.extract_strided_slice %264 {offsets = [0, 64], sizes = [8, 32], strides = [1, 1]} : vector<8x128xf32> to vector<8x32xf32>
    %268 = vector.extract_strided_slice %263 {offsets = [0, 96], sizes = [8, 32], strides = [1, 1]} : vector<8x128xf32> to vector<8x32xf32>
    %269 = arith.mulf %266, %252 : vector<8x32xf32>
    %270 = arith.mulf %265, %267 : vector<8x32xf32>
    %271 = arith.addf %269, %270 : vector<8x32xf32>
    %272 = math.tanh %271 : vector<8x32xf32>
    %273 = arith.mulf %268, %272 : vector<8x32xf32>
    %c0_51 = arith.constant 0 : index
    %c416 = arith.constant 416 : index
    %274 = vector.load %arg4[%c0_51, %c416] : memref<8x480xf32, #tpu.memory_space<vmem>>, vector<8x32xf32>
    tpu.vector_store %arg4[%c0_51, %c416], %273 {strides = array<i32>} : memref<8x480xf32, #tpu.memory_space<vmem>>, vector<8x32xf32>,
    %275 = arith.truncf %273 : vector<8x32xf32> to vector<8x32xbf16>
    %cst_52 = arith.constant dense<0.000000e+00> : vector<8x128xf32>
    %276 = tpu.matmul %275, %6, %cst_52 {dimension_numbers = #tpu.dot_dimension_numbers<[1], [0], [0], [1], [0, 0, 1, 1], [], []>} : vector<8x32xbf16>, vector<32x128xbf16>, vector<8x128xf32> -> vector<8x128xf32>
    %277 = arith.addf %5, %276 : vector<8x128xf32>
    %278 = arith.negf %277 : vector<8x128xf32>
    %279 = math.exp %278 : vector<8x128xf32>
    %cst_53 = arith.constant 1.000000e+00 : f32
    %280 = vector.broadcast %cst_53 : f32 to vector<8x128xf32>
    %281 = arith.addf %280, %279 : vector<8x128xf32>
    %282 = arith.divf %280, %281 : vector<8x128xf32>
    %283 = math.tanh %277 : vector<8x128xf32>
    %284 = vector.extract_strided_slice %282 {offsets = [0, 0], sizes = [8, 32], strides = [1, 1]} : vector<8x128xf32> to vector<8x32xf32>
    %285 = vector.extract_strided_slice %282 {offsets = [0, 32], sizes = [8, 32], strides = [1, 1]} : vector<8x128xf32> to vector<8x32xf32>
    %286 = vector.extract_strided_slice %283 {offsets = [0, 64], sizes = [8, 32], strides = [1, 1]} : vector<8x128xf32> to vector<8x32xf32>
    %287 = vector.extract_strided_slice %282 {offsets = [0, 96], sizes = [8, 32], strides = [1, 1]} : vector<8x128xf32> to vector<8x32xf32>
    %288 = arith.mulf %285, %271 : vector<8x32xf32>
    %289 = arith.mulf %284, %286 : vector<8x32xf32>
    %290 = arith.addf %288, %289 : vector<8x32xf32>
    %291 = math.tanh %290 : vector<8x32xf32>
    %292 = arith.mulf %287, %291 : vector<8x32xf32>
    %c0_54 = arith.constant 0 : index
    %c448 = arith.constant 448 : index
    %293 = vector.load %arg4[%c0_54, %c448] : memref<8x480xf32, #tpu.memory_space<vmem>>, vector<8x32xf32>
    tpu.vector_store %arg4[%c0_54, %c448], %292 {strides = array<i32>} : memref<8x480xf32, #tpu.memory_space<vmem>>, vector<8x32xf32>,
    return
  }
}

</mosaic_0001>

<llo_original>
// kernel: tpu_custom_call.1
$region0: #{tpu_custom_call.1}
  #allocation0 [shape = 'u32[]', space=smem, size = 0x4, offset = 0x4, fixed_abs, tag = 'smem constant byte address 0x4 - core index']
  #allocation1 [shape = 'u32[144,128]{1,0:T(1,128)}', space=vmem, size = 0x12000, scoped, tag = 'internal scratch']
  %s0 = inlined_call_operand.hbm [shape: bf16[8,32], index: 0, kind: input, shape index: {}]
  %s1 = inlined_call_operand.hbm [shape: bf16[32,128], index: 1, kind: input, shape index: {}]
  %s2 = inlined_call_operand.hbm [shape: bf16[32,128], index: 2, kind: input, shape index: {}]
  %s3 = inlined_call_operand.vmem [shape: f32[1,128], index: 3, kind: input, shape index: {}]
  %s4 = inlined_call_operand.hbm [shape: f32[8,480], index: 4, kind: output, shape index: {}]
  %s5 = sld [smem:[#allocation0]]
  $region38: #{tpu_custom_call.1} parent=0
    _
  %s7 = ssub.s32 1, %s5
  %s8 = scalar_select 0, %s7, %s5
  $region1: #{tpu_custom_call.1} parent=0
    #allocation2 [shape = 'u8[2048]{0}', space=vmem, size = 0x800, scoped, tag = 'input window, operand 0, single buffered']
    #allocation3 [shape = 's32[1]{0}', space=sflag, size = 0x4, scoped, tag = 'scoped memory for tpu_custom_call.1']
    #allocation4 [shape = 's32[1]{0}', space=sflag, size = 0x4, scoped, tag = 'scoped memory for tpu_custom_call.1']
    #allocation5 [shape = 'u8[8192]{0}', space=vmem, size = 0x2000, scoped, tag = 'input window, operand 1, single buffered']
    #allocation6 [shape = 's32[1]{0}', space=sflag, size = 0x4, scoped, tag = 'scoped memory for tpu_custom_call.1']
    #allocation7 [shape = 'u8[8192]{0}', space=vmem, size = 0x2000, scoped, tag = 'input window, operand 2, single buffered']
    #allocation8 [shape = 'u8[16384]{0}', space=vmem, size = 0x4000, scoped, tag = 'output window, operand 0, single buffered']
    %9 = vsyncpa [#allocation3], 0
    %10 = vsyncpa [#allocation6], 0
    %11 = vsyncpa [#allocation4], 0
    // Predicated region
    $region2: #{tpu_custom_call.1} parent=1 // pred_check
      _
    $region3: #{tpu_custom_call.1} parent=1 // pred_check_branch
      %13 = sbr.rel (0) target = $region5
    $region4: #{tpu_custom_call.1} parent=1 // pred_region
      %s15 = ssub.s32 64, 64
      %16 = vsyncadd [#allocation3], %s15
      %s18 = sshll.u32 [#allocation2], 4
      %s19 = int_to_ptr.vmem [resolvable:$true] %s18
      %21 = dma.hbm_to_vmem [thread:$0]  %s0, 64, %s19, [#allocation3]
    $region5: #{tpu_custom_call.1} parent=1 // pred_fallthru
      _
    // Predicated region
    $region6: #{tpu_custom_call.1} parent=1 // pred_check
      _
    $region7: #{tpu_custom_call.1} parent=1 // pred_check_branch
      %23 = sbr.rel (0) target = $region9
    $region8: #{tpu_custom_call.1} parent=1 // pred_region
      %s25 = ssub.s32 256, 256
      %26 = vsyncadd [#allocation6], %s25
      %s27 = sshll.u32 [#allocation5], 4
      %s28 = int_to_ptr.vmem [resolvable:$true] %s27
      %33 = dma.hbm_to_vmem [thread:$0]  %s1, 256, %s28, [#allocation6], 64, 64, 4
    $region9: #{tpu_custom_call.1} parent=1 // pred_fallthru
      _
    // Predicated region
    $region10: #{tpu_custom_call.1} parent=1 // pred_check
      _
    $region11: #{tpu_custom_call.1} parent=1 // pred_check_branch
      %35 = sbr.rel (0) target = $region13
    $region12: #{tpu_custom_call.1} parent=1 // pred_region
      %s37 = ssub.s32 256, 256
      %38 = vsyncadd [#allocation6], %s37
      %s39 = sshll.u32 [#allocation7], 4
      %s40 = int_to_ptr.vmem [resolvable:$true] %s39
      %45 = dma.hbm_to_vmem [thread:$0]  %s2, 256, %s40, [#allocation6], 64, 64, 4
    $region13: #{tpu_custom_call.1} parent=1 // pred_fallthru
      _
    // Predicated region
    $region14: #{tpu_custom_call.1} parent=1 // pred_check
      _
    $region15: #{tpu_custom_call.1} parent=1 // pred_check_branch
      %47 = sbr.rel (0) target = $region17
    $region16: #{tpu_custom_call.1} parent=1 // pred_region
      _
    $region17: #{tpu_custom_call.1} parent=1 // pred_fallthru
      _
    // Predicated region
    $region18: #{tpu_custom_call.1} parent=1 // pred_check
      _
    $region19: #{tpu_custom_call.1} parent=1 // pred_check_branch
      %49 = sbr.rel (0) target = $region21
    $region20: #{tpu_custom_call.1} parent=1 // pred_region
      %50 = dma.done [#allocation3], 64
    $region21: #{tpu_custom_call.1} parent=1 // pred_fallthru
      _
    // Predicated region
    $region22: #{tpu_custom_call.1} parent=1 // pred_check
      _
    $region23: #{tpu_custom_call.1} parent=1 // pred_check_branch
      %52 = sbr.rel (0) target = $region25
    $region24: #{tpu_custom_call.1} parent=1 // pred_region
      %53 = dma.done [#allocation6], 256
    $region25: #{tpu_custom_call.1} parent=1 // pred_fallthru
      _
    // Predicated region
    $region26: #{tpu_custom_call.1} parent=1 // pred_check
      _
    $region27: #{tpu_custom_call.1} parent=1 // pred_check_branch
      %55 = sbr.rel (0) target = $region29
    $region28: #{tpu_custom_call.1} parent=1 // pred_region
      %56 = dma.done [#allocation6], 256
    $region29: #{tpu_custom_call.1} parent=1 // pred_fallthru
      _
    %v58 = vld [vmem:[#allocation2] sm:$0xf]
    %v59 = vld [vmem:[#allocation5] sm:$0xf]
    %v60 = vld [vmem:[#allocation5 + $0x4] sm:$0xf]
    %v61 = vld [vmem:[#allocation5 + $0x8] sm:$0xf]
    %v62 = vld [vmem:[#allocation5 + $0xc] sm:$0xf]
    %v63 = vld [vmem:[%s3] sm:$0x1]
    %v65 = vlaneseq
    %v66 = vshrl.u32 %v65, 7
    %v67 = vsub.s32 0, %v66
    %v68 = vrot.slane %v63, %v67
    %v74 = vunpack.c.l.b16 %v59
    %v75 = vunpack.c.l.b16 %v60
    %v76 = vunpack.c.l.b16 %v61
    %v77 = vunpack.c.l.b16 %v62
    %v78 = vpack.c.b16 %v75, %v74
    %v79 = vpack.c.b16 %v77, %v76
    %vm82 = vcmask 261120
    %v84 = vsel %vm82, %v58, 0
    %86 = vmatprep.subr.bf16.mxu0 0
    %87 = vmatpush1.bf16.msra.mxu0 %v78
    %88 = vmatprep.subr.bf16.mxu0 0
    %89 = vmatpush1.bf16.msra.mxu0 %v79
    %90 = vmatprep.subr.bf16.mxu0 0
    %91 = vmatpush1.bf16.msra.mxu0 0
    %92 = vmatprep.subr.bf16.mxu0 0
    %93 = vmatpush1.bf16.msra.mxu0 0
    %94 = vmatprep.subr.bf16.mxu0 0
    %95 = vmatpush1.bf16.msra.mxu0 0
    %96 = vmatprep.subr.bf16.mxu0 0
    %97 = vmatpush1.bf16.msra.mxu0 0
    %98 = vmatprep.subr.bf16.mxu0 0
    %99 = vmatpush1.bf16.msra.mxu0 0
    %100 = vmatprep.subr.bf16.mxu0 0
    %101 = vmatpush1.bf16.msra.mxu0 0
    %102 = vmatprep.subr.bf16.mxu0 0
    %103 = vmatpush1.bf16.msra.mxu0 0
    %104 = vmatprep.subr.bf16.mxu0 0
    %105 = vmatpush1.bf16.msra.mxu0 0
    %106 = vmatprep.subr.bf16.mxu0 0
    %107 = vmatpush1.bf16.msra.mxu0 0
    %108 = vmatprep.subr.bf16.mxu0 0
    %109 = vmatpush1.bf16.msra.mxu0 0
    %110 = vmatprep.subr.bf16.mxu0 0
    %111 = vmatpush1.bf16.msra.mxu0 0
    %112 = vmatprep.subr.bf16.mxu0 0
    %113 = vmatpush1.bf16.msra.mxu0 0
    %114 = vmatprep.subr.bf16.mxu0 0
    %115 = vmatpush1.bf16.msra.mxu0 0
    %116 = vmatprep.subr.bf16.mxu0 0
    %117 = vmatpush1.bf16.msra.mxu0 0
    %118 = vmatprep.mubr.bf16.mxu0 0
    %119 = vmatmul.mubr.bf16.gmra.mrb[0].mxu0 %v84
    %v120 = vpop.f32.mrb[0].mxu0
    %v121 = vadd.f32 %v68, %v120
    %v122 = vpop.f32.mrb[0].mxu0
    %v123 = vpop.f32.mrb[0].mxu0
    %v124 = vpop.f32.mrb[0].mxu0
    %125 = vdwg.mxu0
    %v126 = vld [vmem:[#allocation7] sm:$0xf]
    %v127 = vld [vmem:[#allocation7 + $0x4] sm:$0xf]
    %v128 = vld [vmem:[#allocation7 + $0x8] sm:$0xf]
    %v129 = vld [vmem:[#allocation7 + $0xc] sm:$0xf]
    %v130 = vpack.c.bf16 0.01, 0.01
    %v135 = vunpack.c.l.b16 %v126
    %v136 = vunpack.c.l.b16 %v127
    %v137 = vunpack.c.l.b16 %v128
    %v138 = vunpack.c.l.b16 %v129
    %v139 = vpack.c.b16 %v136, %v135
    %v140 = vpack.c.b16 %v138, %v137
    %v144 = vsel %vm82, %v130, 0
    %146 = vmatprep.subr.bf16.mxu0 0
    %147 = vmatpush1.bf16.msra.mxu0 %v139
    %148 = vmatprep.subr.bf16.mxu0 0
    %149 = vmatpush1.bf16.msra.mxu0 %v140
    %150 = vmatprep.subr.bf16.mxu0 0
    %151 = vmatpush1.bf16.msra.mxu0 0
    %152 = vmatprep.subr.bf16.mxu0 0
    %153 = vmatpush1.bf16.msra.mxu0 0
    %154 = vmatprep.subr.bf16.mxu0 0
    %155 = vmatpush1.bf16.msra.mxu0 0
    %156 = vmatprep.subr.bf16.mxu0 0
    %157 = vmatpush1.bf16.msra.mxu0 0
    %158 = vmatprep.subr.bf16.mxu0 0
    %159 = vmatpush1.bf16.msra.mxu0 0
    %160 = vmatprep.subr.bf16.mxu0 0
    %161 = vmatpush1.bf16.msra.mxu0 0
    %162 = vmatprep.subr.bf16.mxu0 0
    %163 = vmatpush1.bf16.msra.mxu0 0
    %164 = vmatprep.subr.bf16.mxu0 0
    %165 = vmatpush1.bf16.msra.mxu0 0
    %166 = vmatprep.subr.bf16.mxu0 0
    %167 = vmatpush1.bf16.msra.mxu0 0
    %168 = vmatprep.subr.bf16.mxu0 0
    %169 = vmatpush1.bf16.msra.mxu0 0
    %170 = vmatprep.subr.bf16.mxu0 0
    %171 = vmatpush1.bf16.msra.mxu0 0
    %172 = vmatprep.subr.bf16.mxu0 0
    %173 = vmatpush1.bf16.msra.mxu0 0
    %174 = vmatprep.subr.bf16.mxu0 0
    %175 = vmatpush1.bf16.msra.mxu0 0
    %176 = vmatprep.subr.bf16.mxu0 0
    %177 = vmatpush1.bf16.msra.mxu0 0
    %178 = vmatprep.mubr.bf16.mxu0 0
    %179 = vmatmul.mubr.bf16.gmra.mrb[0].mxu0 %v144
    %v180 = vpop.f32.mrb[0].mxu0
    %v181 = vadd.f32 0.0, %v180
    %v182 = vpop.f32.mrb[0].mxu0
    %v183 = vpop.f32.mrb[0].mxu0
    %v184 = vpop.f32.mrb[0].mxu0
    %185 = vdwg.mxu0
    %v186 = vadd.f32 %v121, %v181
    %v187 = vxor.u32 %v186, 2147483648
    %v188 = vmul.f32 %v187, 1.442695
    %v189 = vpow.pop %v188
    %v190 = vadd.f32 %v189, 1.0
    %v191 = vrcp.pop %v190
    %v192 = vmul.f32 1.0, %v191
    %v193 = vtanh.pop %v186
    %v194 = vmul.f32 %v192, 0.01
    %196 = vrot.lane.b32.xlu0 %v193, 64
    %v197 = vpop.permute.xlu0 %196
    %v199 = vmul.f32 %v192, %v197
    %201 = vrot.lane.b32.xlu0 %v199, 32
    %v202 = vpop.permute.xlu0 %201
    %v204 = vadd.f32 %v194, %v202
    %v205 = vtanh.pop %v204
    %207 = vrot.lane.b32.xlu0 %v205, 64
    %v208 = vpop.permute.xlu0 %207
    %v210 = vmul.f32 %v192, %v208
    %212 = vrot.lane.b32.xlu0 %v210, 32
    %v213 = vpop.permute.xlu0 %212
    %215 = vst.msk [vmem:[#allocation8] sm:$0xff] %vm82, %v213
    %v216 = vpack.c.bf16 %v210, %v210
    %218 = vrot.lane.b32.xlu0 %v216, 32
    %v219 = vpop.permute.xlu0 %218
    %v221 = vsel %vm82, %v219, 0
    %223 = vmatprep.subr.bf16.mxu0 0
    %224 = vmatpush1.bf16.msra.mxu0 %v139
    %225 = vmatprep.subr.bf16.mxu0 0
    %226 = vmatpush1.bf16.msra.mxu0 %v140
    %227 = vmatprep.subr.bf16.mxu0 0
    %228 = vmatpush1.bf16.msra.mxu0 0
    %229 = vmatprep.subr.bf16.mxu0 0
    %230 = vmatpush1.bf16.msra.mxu0 0
    %231 = vmatprep.subr.bf16.mxu0 0
    %232 = vmatpush1.bf16.msra.mxu0 0
    %233 = vmatprep.subr.bf16.mxu0 0
    %234 = vmatpush1.bf16.msra.mxu0 0
    %235 = vmatprep.subr.bf16.mxu0 0
    %236 = vmatpush1.bf16.msra.mxu0 0
    %237 = vmatprep.subr.bf16.mxu0 0
    %238 = vmatpush1.bf16.msra.mxu0 0
    %239 = vmatprep.subr.bf16.mxu0 0
    %240 = vmatpush1.bf16.msra.mxu0 0
    %241 = vmatprep.subr.bf16.mxu0 0
    %242 = vmatpush1.bf16.msra.mxu0 0
    %243 = vmatprep.subr.bf16.mxu0 0
    %244 = vmatpush1.bf16.msra.mxu0 0
    %245 = vmatprep.subr.bf16.mxu0 0
    %246 = vmatpush1.bf16.msra.mxu0 0
    %247 = vmatprep.subr.bf16.mxu0 0
    %248 = vmatpush1.bf16.msra.mxu0 0
    %249 = vmatprep.subr.bf16.mxu0 0
    %250 = vmatpush1.bf16.msra.mxu0 0
    %251 = vmatprep.subr.bf16.mxu0 0
    %252 = vmatpush1.bf16.msra.mxu0 0
    %253 = vmatprep.subr.bf16.mxu0 0
    %254 = vmatpush1.bf16.msra.mxu0 0
    %255 = vmatprep.mubr.bf16.mxu0 0
    %256 = vmatmul.mubr.bf16.gmra.mrb[0].mxu0 %v221
    %v257 = vpop.f32.mrb[0].mxu0
    %v258 = vadd.f32 0.0, %v257
    %v259 = vpop.f32.mrb[0].mxu0
    %v260 = vpop.f32.mrb[0].mxu0
    %v261 = vpop.f32.mrb[0].mxu0
    %262 = vdwg.mxu0
    %v263 = vadd.f32 %v121, %v258
    %v264 = vxor.u32 %v263, 2147483648
    %v265 = vmul.f32 %v264, 1.442695
    %v266 = vpow.pop %v265
    %v267 = vadd.f32 %v266, 1.0
    %v268 = vrcp.pop %v267
    %v269 = vmul.f32 1.0, %v268
    %v270 = vtanh.pop %v263
    %v271 = vmul.f32 %v269, %v204
    %273 = vrot.lane.b32.xlu0 %v270, 64
    %v274 = vpop.permute.xlu0 %273
    %v276 = vmul.f32 %v269, %v274
    %278 = vrot.lane.b32.xlu0 %v276, 32
    %v279 = vpop.permute.xlu0 %278
    %v281 = vadd.f32 %v271, %v279
    %v282 = vtanh.pop %v281
    %284 = vrot.lane.b32.xlu0 %v282, 64
    %v285 = vpop.permute.xlu0 %284
    %v287 = vmul.f32 %v269, %v285
    %289 = vrot.lane.b32.xlu0 %v287, 64
    %v290 = vpop.permute.xlu0 %289
    %vm292 = vcmask 523520
    %293 = vst.msk [vmem:[#allocation8] sm:$0xff] %vm292, %v290
    %v294 = vpack.c.bf16 %v287, %v287
    %296 = vrot.lane.b32.xlu0 %v294, 32
    %v297 = vpop.permute.xlu0 %296
    %v299 = vsel %vm82, %v297, 0
    %301 = vmatprep.subr.bf16.mxu0 0
    %302 = vmatpush1.bf16.msra.mxu0 %v139
    %303 = vmatprep.subr.bf16.mxu0 0
    %304 = vmatpush1.bf16.msra.mxu0 %v140
    %305 = vmatprep.subr.bf16.mxu0 0
    %306 = vmatpush1.bf16.msra.mxu0 0
    %307 = vmatprep.subr.bf16.mxu0 0
    %308 = vmatpush1.bf16.msra.mxu0 0
    %309 = vmatprep.subr.bf16.mxu0 0
    %310 = vmatpush1.bf16.msra.mxu0 0
    %311 = vmatprep.subr.bf16.mxu0 0
    %312 = vmatpush1.bf16.msra.mxu0 0
    %313 = vmatprep.subr.bf16.mxu0 0
    %314 = vmatpush1.bf16.msra.mxu0 0
    %315 = vmatprep.subr.bf16.mxu0 0
    %316 = vmatpush1.bf16.msra.mxu0 0
    %317 = vmatprep.subr.bf16.mxu0 0
    %318 = vmatpush1.bf16.msra.mxu0 0
    %319 = vmatprep.subr.bf16.mxu0 0
    %320 = vmatpush1.bf16.msra.mxu0 0
    %321 = vmatprep.subr.bf16.mxu0 0
    %322 = vmatpush1.bf16.msra.mxu0 0
    %323 = vmatprep.subr.bf16.mxu0 0
    %324 = vmatpush1.bf16.msra.mxu0 0
    %325 = vmatprep.subr.bf16.mxu0 0
    %326 = vmatpush1.bf16.msra.mxu0 0
    %327 = vmatprep.subr.bf16.mxu0 0
    %328 = vmatpush1.bf16.msra.mxu0 0
    %329 = vmatprep.subr.bf16.mxu0 0
    %330 = vmatpush1.bf16.msra.mxu0 0
    %331 = vmatprep.subr.bf16.mxu0 0
    %332 = vmatpush1.bf16.msra.mxu0 0
    %333 = vmatprep.mubr.bf16.mxu0 0
    %334 = vmatmul.mubr.bf16.gmra.mrb[0].mxu0 %v299
    %v335 = vpop.f32.mrb[0].mxu0
    %v336 = vadd.f32 0.0, %v335
    %v337 = vpop.f32.mrb[0].mxu0
    %v338 = vpop.f32.mrb[0].mxu0
    %v339 = vpop.f32.mrb[0].mxu0
    %340 = vdwg.mxu0
    %v341 = vadd.f32 %v121, %v336
    %v342 = vxor.u32 %v341, 2147483648
    %v343 = vmul.f32 %v342, 1.442695
    %v344 = vpow.pop %v343
    %v345 = vadd.f32 %v344, 1.0
    %v346 = vrcp.pop %v345
    %v347 = vmul.f32 1.0, %v346
    %v348 = vtanh.pop %v341
    %v349 = vmul.f32 %v347, %v281
    %351 = vrot.lane.b32.xlu0 %v348, 64
    %v352 = vpop.permute.xlu0 %351
    %v354 = vmul.f32 %v347, %v352
    %356 = vrot.lane.b32.xlu0 %v354, 32
    %v357 = vpop.permute.xlu0 %356
    %v359 = vadd.f32 %v349, %v357
    %v360 = vtanh.pop %v359
    %362 = vrot.lane.b32.xlu0 %v360, 64
    %v363 = vpop.permute.xlu0 %362
    %v365 = vmul.f32 %v347, %v363
    %367 = vrot.lane.b32.xlu0 %v365, 96
    %v368 = vpop.permute.xlu0 %367
    %vm370 = vcmask 785920
    %371 = vst.msk [vmem:[#allocation8] sm:$0xff] %vm370, %v368
    %v372 = vpack.c.bf16 %v365, %v365
    %374 = vrot.lane.b32.xlu0 %v372, 32
    %v375 = vpop.permute.xlu0 %374
    %v377 = vsel %vm82, %v375, 0
    %379 = vmatprep.subr.bf16.mxu0 0
    %380 = vmatpush1.bf16.msra.mxu0 %v139
    %381 = vmatprep.subr.bf16.mxu0 0
    %382 = vmatpush1.bf16.msra.mxu0 %v140
    %383 = vmatprep.subr.bf16.mxu0 0
    %384 = vmatpush1.bf16.msra.mxu0 0
    %385 = vmatprep.subr.bf16.mxu0 0
    %386 = vmatpush1.bf16.msra.mxu0 0
    %387 = vmatprep.subr.bf16.mxu0 0
    %388 = vmatpush1.bf16.msra.mxu0 0
    %389 = vmatprep.subr.bf16.mxu0 0
    %390 = vmatpush1.bf16.msra.mxu0 0
    %391 = vmatprep.subr.bf16.mxu0 0
    %392 = vmatpush1.bf16.msra.mxu0 0
    %393 = vmatprep.subr.bf16.mxu0 0
    %394 = vmatpush1.bf16.msra.mxu0 0
    %395 = vmatprep.subr.bf16.mxu0 0
    %396 = vmatpush1.bf16.msra.mxu0 0
    %397 = vmatprep.subr.bf16.mxu0 0
    %398 = vmatpush1.bf16.msra.mxu0 0
    %399 = vmatprep.subr.bf16.mxu0 0
    %400 = vmatpush1.bf16.msra.mxu0 0
    %401 = vmatprep.subr.bf16.mxu0 0
    %402 = vmatpush1.bf16.msra.mxu0 0
    %403 = vmatprep.subr.bf16.mxu0 0
    %404 = vmatpush1.bf16.msra.mxu0 0
    %405 = vmatprep.subr.bf16.mxu0 0
    %406 = vmatpush1.bf16.msra.mxu0 0
    %407 = vmatprep.subr.bf16.mxu0 0
    %408 = vmatpush1.bf16.msra.mxu0 0
    %409 = vmatprep.subr.bf16.mxu0 0
    %410 = vmatpush1.bf16.msra.mxu0 0
    %411 = vmatprep.mubr.bf16.mxu0 0
    %412 = vmatmul.mubr.bf16.gmra.mrb[0].mxu0 %v377
    %v413 = vpop.f32.mrb[0].mxu0
    %v414 = vadd.f32 0.0, %v413
    %v415 = vpop.f32.mrb[0].mxu0
    %v416 = vpop.f32.mrb[0].mxu0
    %v417 = vpop.f32.mrb[0].mxu0
    %418 = vdwg.mxu0
    %v419 = vadd.f32 %v121, %v414
    %v420 = vxor.u32 %v419, 2147483648
    %v421 = vmul.f32 %v420, 1.442695
    %v422 = vpow.pop %v421
    %v423 = vadd.f32 %v422, 1.0
    %v424 = vrcp.pop %v423
    %v425 = vmul.f32 1.0, %v424
    %v426 = vtanh.pop %v419
    %v427 = vmul.f32 %v425, %v359
    %429 = vrot.lane.b32.xlu0 %v426, 64
    %v430 = vpop.permute.xlu0 %429
    %v432 = vmul.f32 %v425, %v430
    %434 = vrot.lane.b32.xlu0 %v432, 32
    %v435 = vpop.permute.xlu0 %434
    %v437 = vadd.f32 %v427, %v435
    %v438 = vtanh.pop %v437
    %440 = vrot.lane.b32.xlu0 %v438, 64
    %v441 = vpop.permute.xlu0 %440
    %v443 = vmul.f32 %v425, %v441
    %vm444 = vcmask 1048320
    %445 = vst.msk [vmem:[#allocation8] sm:$0xff] %vm444, %v443
    %v446 = vpack.c.bf16 %v443, %v443
    %448 = vrot.lane.b32.xlu0 %v446, 32
    %v449 = vpop.permute.xlu0 %448
    %v451 = vsel %vm82, %v449, 0
    %453 = vmatprep.subr.bf16.mxu0 0
    %454 = vmatpush1.bf16.msra.mxu0 %v139
    %455 = vmatprep.subr.bf16.mxu0 0
    %456 = vmatpush1.bf16.msra.mxu0 %v140
    %457 = vmatprep.subr.bf16.mxu0 0
    %458 = vmatpush1.bf16.msra.mxu0 0
    %459 = vmatprep.subr.bf16.mxu0 0
    %460 = vmatpush1.bf16.msra.mxu0 0
    %461 = vmatprep.subr.bf16.mxu0 0
    %462 = vmatpush1.bf16.msra.mxu0 0
    %463 = vmatprep.subr.bf16.mxu0 0
    %464 = vmatpush1.bf16.msra.mxu0 0
    %465 = vmatprep.subr.bf16.mxu0 0
    %466 = vmatpush1.bf16.msra.mxu0 0
    %467 = vmatprep.subr.bf16.mxu0 0
    %468 = vmatpush1.bf16.msra.mxu0 0
    %469 = vmatprep.subr.bf16.mxu0 0
    %470 = vmatpush1.bf16.msra.mxu0 0
    %471 = vmatprep.subr.bf16.mxu0 0
    %472 = vmatpush1.bf16.msra.mxu0 0
    %473 = vmatprep.subr.bf16.mxu0 0
    %474 = vmatpush1.bf16.msra.mxu0 0
    %475 = vmatprep.subr.bf16.mxu0 0
    %476 = vmatpush1.bf16.msra.mxu0 0
    %477 = vmatprep.subr.bf16.mxu0 0
    %478 = vmatpush1.bf16.msra.mxu0 0
    %479 = vmatprep.subr.bf16.mxu0 0
    %480 = vmatpush1.bf16.msra.mxu0 0
    %481 = vmatprep.subr.bf16.mxu0 0
    %482 = vmatpush1.bf16.msra.mxu0 0
    %483 = vmatprep.subr.bf16.mxu0 0
    %484 = vmatpush1.bf16.msra.mxu0 0
    %485 = vmatprep.mubr.bf16.mxu0 0
    %486 = vmatmul.mubr.bf16.gmra.mrb[0].mxu0 %v451
    %v487 = vpop.f32.mrb[0].mxu0
    %v488 = vadd.f32 0.0, %v487
    %v489 = vpop.f32.mrb[0].mxu0
    %v490 = vpop.f32.mrb[0].mxu0
    %v491 = vpop.f32.mrb[0].mxu0
    %492 = vdwg.mxu0
    %v493 = vadd.f32 %v121, %v488
    %v494 = vxor.u32 %v493, 2147483648
    %v495 = vmul.f32 %v494, 1.442695
    %v496 = vpow.pop %v495
    %v497 = vadd.f32 %v496, 1.0
    %v498 = vrcp.pop %v497
    %v499 = vmul.f32 1.0, %v498
    %v500 = vtanh.pop %v493
    %v501 = vmul.f32 %v499, %v437
    %503 = vrot.lane.b32.xlu0 %v500, 64
    %v504 = vpop.permute.xlu0 %503
    %v506 = vmul.f32 %v499, %v504
    %508 = vrot.lane.b32.xlu0 %v506, 32
    %v509 = vpop.permute.xlu0 %508
    %v511 = vadd.f32 %v501, %v509
    %v512 = vtanh.pop %v511
    %514 = vrot.lane.b32.xlu0 %v512, 64
    %v515 = vpop.permute.xlu0 %514
    %v517 = vmul.f32 %v499, %v515
    %519 = vrot.lane.b32.xlu0 %v517, 32
    %v520 = vpop.permute.xlu0 %519
    %522 = vst.msk [vmem:[#allocation8 + $0x8] sm:$0xff] %vm82, %v520
    %v523 = vpack.c.bf16 %v517, %v517
    %525 = vrot.lane.b32.xlu0 %v523, 32
    %v526 = vpop.permute.xlu0 %525
    %v528 = vsel %vm82, %v526, 0
    %530 = vmatprep.subr.bf16.mxu0 0
    %531 = vmatpush1.bf16.msra.mxu0 %v139
    %532 = vmatprep.subr.bf16.mxu0 0
    %533 = vmatpush1.bf16.msra.mxu0 %v140
    %534 = vmatprep.subr.bf16.mxu0 0
    %535 = vmatpush1.bf16.msra.mxu0 0
    %536 = vmatprep.subr.bf16.mxu0 0
    %537 = vmatpush1.bf16.msra.mxu0 0
    %538 = vmatprep.subr.bf16.mxu0 0
    %539 = vmatpush1.bf16.msra.mxu0 0
    %540 = vmatprep.subr.bf16.mxu0 0
    %541 = vmatpush1.bf16.msra.mxu0 0
    %542 = vmatprep.subr.bf16.mxu0 0
    %543 = vmatpush1.bf16.msra.mxu0 0
    %544 = vmatprep.subr.bf16.mxu0 0
    %545 = vmatpush1.bf16.msra.mxu0 0
    %546 = vmatprep.subr.bf16.mxu0 0
    %547 = vmatpush1.bf16.msra.mxu0 0
    %548 = vmatprep.subr.bf16.mxu0 0
    %549 = vmatpush1.bf16.msra.mxu0 0
    %550 = vmatprep.subr.bf16.mxu0 0
    %551 = vmatpush1.bf16.msra.mxu0 0
    %552 = vmatprep.subr.bf16.mxu0 0
    %553 = vmatpush1.bf16.msra.mxu0 0
    %554 = vmatprep.subr.bf16.mxu0 0
    %555 = vmatpush1.bf16.msra.mxu0 0
    %556 = vmatprep.subr.bf16.mxu0 0
    %557 = vmatpush1.bf16.msra.mxu0 0
    %558 = vmatprep.subr.bf16.mxu0 0
    %559 = vmatpush1.bf16.msra.mxu0 0
    %560 = vmatprep.subr.bf16.mxu0 0
    %561 = vmatpush1.bf16.msra.mxu0 0
    %562 = vmatprep.mubr.bf16.mxu0 0
    %563 = vmatmul.mubr.bf16.gmra.mrb[0].mxu0 %v528
    %v564 = vpop.f32.mrb[0].mxu0
    %v565 = vadd.f32 0.0, %v564
    %v566 = vpop.f32.mrb[0].mxu0
    %v567 = vpop.f32.mrb[0].mxu0
    %v568 = vpop.f32.mrb[0].mxu0
    %569 = vdwg.mxu0
    %v570 = vadd.f32 %v121, %v565
    %v571 = vxor.u32 %v570, 2147483648
    %v572 = vmul.f32 %v571, 1.442695
    %v573 = vpow.pop %v572
    %v574 = vadd.f32 %v573, 1.0
    %v575 = vrcp.pop %v574
    %v576 = vmul.f32 1.0, %v575
    %v577 = vtanh.pop %v570
    %v578 = vmul.f32 %v576, %v511
    %580 = vrot.lane.b32.xlu0 %v577, 64
    %v581 = vpop.permute.xlu0 %580
    %v583 = vmul.f32 %v576, %v581
    %585 = vrot.lane.b32.xlu0 %v583, 32
    %v586 = vpop.permute.xlu0 %585
    %v588 = vadd.f32 %v578, %v586
    %v589 = vtanh.pop %v588
    %591 = vrot.lane.b32.xlu0 %v589, 64
    %v592 = vpop.permute.xlu0 %591
    %v594 = vmul.f32 %v576, %v592
    %596 = vrot.lane.b32.xlu0 %v594, 64
    %v597 = vpop.permute.xlu0 %596
    %599 = vst.msk [vmem:[#allocation8 + $0x8] sm:$0xff] %vm292, %v597
    %v600 = vpack.c.bf16 %v594, %v594
    %602 = vrot.lane.b32.xlu0 %v600, 32
    %v603 = vpop.permute.xlu0 %602
    %v605 = vsel %vm82, %v603, 0
    %607 = vmatprep.subr.bf16.mxu0 0
    %608 = vmatpush1.bf16.msra.mxu0 %v139
    %609 = vmatprep.subr.bf16.mxu0 0
    %610 = vmatpush1.bf16.msra.mxu0 %v140
    %611 = vmatprep.subr.bf16.mxu0 0
    %612 = vmatpush1.bf16.msra.mxu0 0
    %613 = vmatprep.subr.bf16.mxu0 0
    %614 = vmatpush1.bf16.msra.mxu0 0
    %615 = vmatprep.subr.bf16.mxu0 0
    %616 = vmatpush1.bf16.msra.mxu0 0
    %617 = vmatprep.subr.bf16.mxu0 0
    %618 = vmatpush1.bf16.msra.mxu0 0
    %619 = vmatprep.subr.bf16.mxu0 0
    %620 = vmatpush1.bf16.msra.mxu0 0
    %621 = vmatprep.subr.bf16.mxu0 0
    %622 = vmatpush1.bf16.msra.mxu0 0
    %623 = vmatprep.subr.bf16.mxu0 0
    %624 = vmatpush1.bf16.msra.mxu0 0
    %625 = vmatprep.subr.bf16.mxu0 0
    %626 = vmatpush1.bf16.msra.mxu0 0
    %627 = vmatprep.subr.bf16.mxu0 0
    %628 = vmatpush1.bf16.msra.mxu0 0
    %629 = vmatprep.subr.bf16.mxu0 0
    %630 = vmatpush1.bf16.msra.mxu0 0
    %631 = vmatprep.subr.bf16.mxu0 0
    %632 = vmatpush1.bf16.msra.mxu0 0
    %633 = vmatprep.subr.bf16.mxu0 0
    %634 = vmatpush1.bf16.msra.mxu0 0
    %635 = vmatprep.subr.bf16.mxu0 0
    %636 = vmatpush1.bf16.msra.mxu0 0
    %637 = vmatprep.subr.bf16.mxu0 0
    %638 = vmatpush1.bf16.msra.mxu0 0
    %639 = vmatprep.mubr.bf16.mxu0 0
    %640 = vmatmul.mubr.bf16.gmra.mrb[0].mxu0 %v605
    %v641 = vpop.f32.mrb[0].mxu0
    %v642 = vadd.f32 0.0, %v641
    %v643 = vpop.f32.mrb[0].mxu0
    %v644 = vpop.f32.mrb[0].mxu0
    %v645 = vpop.f32.mrb[0].mxu0
    %646 = vdwg.mxu0
    %v647 = vadd.f32 %v121, %v642
    %v648 = vxor.u32 %v647, 2147483648
    %v649 = vmul.f32 %v648, 1.442695
    %v650 = vpow.pop %v649
    %v651 = vadd.f32 %v650, 1.0
    %v652 = vrcp.pop %v651
    %v653 = vmul.f32 1.0, %v652
    %v654 = vtanh.pop %v647
    %v655 = vmul.f32 %v653, %v588
    %657 = vrot.lane.b32.xlu0 %v654, 64
    %v658 = vpop.permute.xlu0 %657
    %v660 = vmul.f32 %v653, %v658
    %662 = vrot.lane.b32.xlu0 %v660, 32
    %v663 = vpop.permute.xlu0 %662
    %v665 = vadd.f32 %v655, %v663
    %v666 = vtanh.pop %v665
    %668 = vrot.lane.b32.xlu0 %v666, 64
    %v669 = vpop.permute.xlu0 %668
    %v671 = vmul.f32 %v653, %v669
    %673 = vrot.lane.b32.xlu0 %v671, 96
    %v674 = vpop.permute.xlu0 %673
    %676 = vst.msk [vmem:[#allocation8 + $0x8] sm:$0xff] %vm370, %v674
    %v677 = vpack.c.bf16 %v671, %v671
    %679 = vrot.lane.b32.xlu0 %v677, 32
    %v680 = vpop.permute.xlu0 %679
    %v682 = vsel %vm82, %v680, 0
    %684 = vmatprep.subr.bf16.mxu0 0
    %685 = vmatpush1.bf16.msra.mxu0 %v139
    %686 = vmatprep.subr.bf16.mxu0 0
    %687 = vmatpush1.bf16.msra.mxu0 %v140
    %688 = vmatprep.subr.bf16.mxu0 0
    %689 = vmatpush1.bf16.msra.mxu0 0
    %690 = vmatprep.subr.bf16.mxu0 0
    %691 = vmatpush1.bf16.msra.mxu0 0
    %692 = vmatprep.subr.bf16.mxu0 0
    %693 = vmatpush1.bf16.msra.mxu0 0
    %694 = vmatprep.subr.bf16.mxu0 0
    %695 = vmatpush1.bf16.msra.mxu0 0
    %696 = vmatprep.subr.bf16.mxu0 0
    %697 = vmatpush1.bf16.msra.mxu0 0
    %698 = vmatprep.subr.bf16.mxu0 0
    %699 = vmatpush1.bf16.msra.mxu0 0
    %700 = vmatprep.subr.bf16.mxu0 0
    %701 = vmatpush1.bf16.msra.mxu0 0
    %702 = vmatprep.subr.bf16.mxu0 0
    %703 = vmatpush1.bf16.msra.mxu0 0
    %704 = vmatprep.subr.bf16.mxu0 0
    %705 = vmatpush1.bf16.msra.mxu0 0
    %706 = vmatprep.subr.bf16.mxu0 0
    %707 = vmatpush1.bf16.msra.mxu0 0
    %708 = vmatprep.subr.bf16.mxu0 0
    %709 = vmatpush1.bf16.msra.mxu0 0
    %710 = vmatprep.subr.bf16.mxu0 0
    %711 = vmatpush1.bf16.msra.mxu0 0
    %712 = vmatprep.subr.bf16.mxu0 0
    %713 = vmatpush1.bf16.msra.mxu0 0
    %714 = vmatprep.subr.bf16.mxu0 0
    %715 = vmatpush1.bf16.msra.mxu0 0
    %716 = vmatprep.mubr.bf16.mxu0 0
    %717 = vmatmul.mubr.bf16.gmra.mrb[0].mxu0 %v682
    %v718 = vpop.f32.mrb[0].mxu0
    %v719 = vadd.f32 0.0, %v718
    %v720 = vpop.f32.mrb[0].mxu0
    %v721 = vpop.f32.mrb[0].mxu0
    %v722 = vpop.f32.mrb[0].mxu0
    %723 = vdwg.mxu0
    %v724 = vadd.f32 %v121, %v719
    %v725 = vxor.u32 %v724, 2147483648
    %v726 = vmul.f32 %v725, 1.442695
    %v727 = vpow.pop %v726
    %v728 = vadd.f32 %v727, 1.0
    %v729 = vrcp.pop %v728
    %v730 = vmul.f32 1.0, %v729
    %v731 = vtanh.pop %v724
    %v732 = vmul.f32 %v730, %v665
    %734 = vrot.lane.b32.xlu0 %v731, 64
    %v735 = vpop.permute.xlu0 %734
    %v737 = vmul.f32 %v730, %v735
    %739 = vrot.lane.b32.xlu0 %v737, 32
    %v740 = vpop.permute.xlu0 %739
    %v742 = vadd.f32 %v732, %v740
    %v743 = vtanh.pop %v742
    %745 = vrot.lane.b32.xlu0 %v743, 64
    %v746 = vpop.permute.xlu0 %745
    %v748 = vmul.f32 %v730, %v746
    %749 = vst.msk [vmem:[#allocation8 + $0x8] sm:$0xff] %vm444, %v748
    %v750 = vpack.c.bf16 %v748, %v748
    %752 = vrot.lane.b32.xlu0 %v750, 32
    %v753 = vpop.permute.xlu0 %752
    %v755 = vsel %vm82, %v753, 0
    %757 = vmatprep.subr.bf16.mxu0 0
    %758 = vmatpush1.bf16.msra.mxu0 %v139
    %759 = vmatprep.subr.bf16.mxu0 0
    %760 = vmatpush1.bf16.msra.mxu0 %v140
    %761 = vmatprep.subr.bf16.mxu0 0
    %762 = vmatpush1.bf16.msra.mxu0 0
    %763 = vmatprep.subr.bf16.mxu0 0
    %764 = vmatpush1.bf16.msra.mxu0 0
    %765 = vmatprep.subr.bf16.mxu0 0
    %766 = vmatpush1.bf16.msra.mxu0 0
    %767 = vmatprep.subr.bf16.mxu0 0
    %768 = vmatpush1.bf16.msra.mxu0 0
    %769 = vmatprep.subr.bf16.mxu0 0
    %770 = vmatpush1.bf16.msra.mxu0 0
    %771 = vmatprep.subr.bf16.mxu0 0
    %772 = vmatpush1.bf16.msra.mxu0 0
    %773 = vmatprep.subr.bf16.mxu0 0
    %774 = vmatpush1.bf16.msra.mxu0 0
    %775 = vmatprep.subr.bf16.mxu0 0
    %776 = vmatpush1.bf16.msra.mxu0 0
    %777 = vmatprep.subr.bf16.mxu0 0
    %778 = vmatpush1.bf16.msra.mxu0 0
    %779 = vmatprep.subr.bf16.mxu0 0
    %780 = vmatpush1.bf16.msra.mxu0 0
    %781 = vmatprep.subr.bf16.mxu0 0
    %782 = vmatpush1.bf16.msra.mxu0 0
    %783 = vmatprep.subr.bf16.mxu0 0
    %784 = vmatpush1.bf16.msra.mxu0 0
    %785 = vmatprep.subr.bf16.mxu0 0
    %786 = vmatpush1.bf16.msra.mxu0 0
    %787 = vmatprep.subr.bf16.mxu0 0
    %788 = vmatpush1.bf16.msra.mxu0 0
    %789 = vmatprep.mubr.bf16.mxu0 0
    %790 = vmatmul.mubr.bf16.gmra.mrb[0].mxu0 %v755
    %v791 = vpop.f32.mrb[0].mxu0
    %v792 = vadd.f32 0.0, %v791
    %v793 = vpop.f32.mrb[0].mxu0
    %v794 = vpop.f32.mrb[0].mxu0
    %v795 = vpop.f32.mrb[0].mxu0
    %796 = vdwg.mxu0
    %v797 = vadd.f32 %v121, %v792
    %v798 = vxor.u32 %v797, 2147483648
    %v799 = vmul.f32 %v798, 1.442695
    %v800 = vpow.pop %v799
    %v801 = vadd.f32 %v800, 1.0
    %v802 = vrcp.pop %v801
    %v803 = vmul.f32 1.0, %v802
    %v804 = vtanh.pop %v797
    %v805 = vmul.f32 %v803, %v742
    %807 = vrot.lane.b32.xlu0 %v804, 64
    %v808 = vpop.permute.xlu0 %807
    %v810 = vmul.f32 %v803, %v808
    %812 = vrot.lane.b32.xlu0 %v810, 32
    %v813 = vpop.permute.xlu0 %812
    %v815 = vadd.f32 %v805, %v813
    %v816 = vtanh.pop %v815
    %818 = vrot.lane.b32.xlu0 %v816, 64
    %v819 = vpop.permute.xlu0 %818
    %v821 = vmul.f32 %v803, %v819
    %823 = vrot.lane.b32.xlu0 %v821, 32
    %v824 = vpop.permute.xlu0 %823
    %826 = vst.msk [vmem:[#allocation8 + $0x10] sm:$0xff] %vm82, %v824
    %v827 = vpack.c.bf16 %v821, %v821
    %829 = vrot.lane.b32.xlu0 %v827, 32
    %v830 = vpop.permute.xlu0 %829
    %v832 = vsel %vm82, %v830, 0
    %834 = vmatprep.subr.bf16.mxu0 0
    %835 = vmatpush1.bf16.msra.mxu0 %v139
    %836 = vmatprep.subr.bf16.mxu0 0
    %837 = vmatpush1.bf16.msra.mxu0 %v140
    %838 = vmatprep.subr.bf16.mxu0 0
    %839 = vmatpush1.bf16.msra.mxu0 0
    %840 = vmatprep.subr.bf16.mxu0 0
    %841 = vmatpush1.bf16.msra.mxu0 0
    %842 = vmatprep.subr.bf16.mxu0 0
    %843 = vmatpush1.bf16.msra.mxu0 0
    %844 = vmatprep.subr.bf16.mxu0 0
    %845 = vmatpush1.bf16.msra.mxu0 0
    %846 = vmatprep.subr.bf16.mxu0 0
    %847 = vmatpush1.bf16.msra.mxu0 0
    %848 = vmatprep.subr.bf16.mxu0 0
    %849 = vmatpush1.bf16.msra.mxu0 0
    %850 = vmatprep.subr.bf16.mxu0 0
    %851 = vmatpush1.bf16.msra.mxu0 0
    %852 = vmatprep.subr.bf16.mxu0 0
    %853 = vmatpush1.bf16.msra.mxu0 0
    %854 = vmatprep.subr.bf16.mxu0 0
    %855 = vmatpush1.bf16.msra.mxu0 0
    %856 = vmatprep.subr.bf16.mxu0 0
    %857 = vmatpush1.bf16.msra.mxu0 0
    %858 = vmatprep.subr.bf16.mxu0 0
    %859 = vmatpush1.bf16.msra.mxu0 0
    %860 = vmatprep.subr.bf16.mxu0 0
    %861 = vmatpush1.bf16.msra.mxu0 0
    %862 = vmatprep.subr.bf16.mxu0 0
    %863 = vmatpush1.bf16.msra.mxu0 0
    %864 = vmatprep.subr.bf16.mxu0 0
    %865 = vmatpush1.bf16.msra.mxu0 0
    %866 = vmatprep.mubr.bf16.mxu0 0
    %867 = vmatmul.mubr.bf16.gmra.mrb[0].mxu0 %v832
    %v868 = vpop.f32.mrb[0].mxu0
    %v869 = vadd.f32 0.0, %v868
    %v870 = vpop.f32.mrb[0].mxu0
    %v871 = vpop.f32.mrb[0].mxu0
    %v872 = vpop.f32.mrb[0].mxu0
    %873 = vdwg.mxu0
    %v874 = vadd.f32 %v121, %v869
    %v875 = vxor.u32 %v874, 2147483648
    %v876 = vmul.f32 %v875, 1.442695
    %v877 = vpow.pop %v876
    %v878 = vadd.f32 %v877, 1.0
    %v879 = vrcp.pop %v878
    %v880 = vmul.f32 1.0, %v879
    %v881 = vtanh.pop %v874
    %v882 = vmul.f32 %v880, %v815
    %884 = vrot.lane.b32.xlu0 %v881, 64
    %v885 = vpop.permute.xlu0 %884
    %v887 = vmul.f32 %v880, %v885
    %889 = vrot.lane.b32.xlu0 %v887, 32
    %v890 = vpop.permute.xlu0 %889
    %v892 = vadd.f32 %v882, %v890
    %v893 = vtanh.pop %v892
    %895 = vrot.lane.b32.xlu0 %v893, 64
    %v896 = vpop.permute.xlu0 %895
    %v898 = vmul.f32 %v880, %v896
    %900 = vrot.lane.b32.xlu0 %v898, 64
    %v901 = vpop.permute.xlu0 %900
    %903 = vst.msk [vmem:[#allocation8 + $0x10] sm:$0xff] %vm292, %v901
    %v904 = vpack.c.bf16 %v898, %v898
    %906 = vrot.lane.b32.xlu0 %v904, 32
    %v907 = vpop.permute.xlu0 %906
    %v909 = vsel %vm82, %v907, 0
    %911 = vmatprep.subr.bf16.mxu0 0
    %912 = vmatpush1.bf16.msra.mxu0 %v139
    %913 = vmatprep.subr.bf16.mxu0 0
    %914 = vmatpush1.bf16.msra.mxu0 %v140
    %915 = vmatprep.subr.bf16.mxu0 0
    %916 = vmatpush1.bf16.msra.mxu0 0
    %917 = vmatprep.subr.bf16.mxu0 0
    %918 = vmatpush1.bf16.msra.mxu0 0
    %919 = vmatprep.subr.bf16.mxu0 0
    %920 = vmatpush1.bf16.msra.mxu0 0
    %921 = vmatprep.subr.bf16.mxu0 0
    %922 = vmatpush1.bf16.msra.mxu0 0
    %923 = vmatprep.subr.bf16.mxu0 0
    %924 = vmatpush1.bf16.msra.mxu0 0
    %925 = vmatprep.subr.bf16.mxu0 0
    %926 = vmatpush1.bf16.msra.mxu0 0
    %927 = vmatprep.subr.bf16.mxu0 0
    %928 = vmatpush1.bf16.msra.mxu0 0
    %929 = vmatprep.subr.bf16.mxu0 0
    %930 = vmatpush1.bf16.msra.mxu0 0
    %931 = vmatprep.subr.bf16.mxu0 0
    %932 = vmatpush1.bf16.msra.mxu0 0
    %933 = vmatprep.subr.bf16.mxu0 0
    %934 = vmatpush1.bf16.msra.mxu0 0
    %935 = vmatprep.subr.bf16.mxu0 0
    %936 = vmatpush1.bf16.msra.mxu0 0
    %937 = vmatprep.subr.bf16.mxu0 0
    %938 = vmatpush1.bf16.msra.mxu0 0
    %939 = vmatprep.subr.bf16.mxu0 0
    %940 = vmatpush1.bf16.msra.mxu0 0
    %941 = vmatprep.subr.bf16.mxu0 0
    %942 = vmatpush1.bf16.msra.mxu0 0
    %943 = vmatprep.mubr.bf16.mxu0 0
    %944 = vmatmul.mubr.bf16.gmra.mrb[0].mxu0 %v909
    %v945 = vpop.f32.mrb[0].mxu0
    %v946 = vadd.f32 0.0, %v945
    %v947 = vpop.f32.mrb[0].mxu0
    %v948 = vpop.f32.mrb[0].mxu0
    %v949 = vpop.f32.mrb[0].mxu0
    %950 = vdwg.mxu0
    %v951 = vadd.f32 %v121, %v946
    %v952 = vxor.u32 %v951, 2147483648
    %v953 = vmul.f32 %v952, 1.442695
    %v954 = vpow.pop %v953
    %v955 = vadd.f32 %v954, 1.0
    %v956 = vrcp.pop %v955
    %v957 = vmul.f32 1.0, %v956
    %v958 = vtanh.pop %v951
    %v959 = vmul.f32 %v957, %v892
    %961 = vrot.lane.b32.xlu0 %v958, 64
    %v962 = vpop.permute.xlu0 %961
    %v964 = vmul.f32 %v957, %v962
    %966 = vrot.lane.b32.xlu0 %v964, 32
    %v967 = vpop.permute.xlu0 %966
    %v969 = vadd.f32 %v959, %v967
    %v970 = vtanh.pop %v969
    %972 = vrot.lane.b32.xlu0 %v970, 64
    %v973 = vpop.permute.xlu0 %972
    %v975 = vmul.f32 %v957, %v973
    %977 = vrot.lane.b32.xlu0 %v975, 96
    %v978 = vpop.permute.xlu0 %977
    %980 = vst.msk [vmem:[#allocation8 + $0x10] sm:$0xff] %vm370, %v978
    %v981 = vpack.c.bf16 %v975, %v975
    %983 = vrot.lane.b32.xlu0 %v981, 32
    %v984 = vpop.permute.xlu0 %983
    %v986 = vsel %vm82, %v984, 0
    %988 = vmatprep.subr.bf16.mxu0 0
    %989 = vmatpush1.bf16.msra.mxu0 %v139
    %990 = vmatprep.subr.bf16.mxu0 0
    %991 = vmatpush1.bf16.msra.mxu0 %v140
    %992 = vmatprep.subr.bf16.mxu0 0
    %993 = vmatpush1.bf16.msra.mxu0 0
    %994 = vmatprep.subr.bf16.mxu0 0
    %995 = vmatpush1.bf16.msra.mxu0 0
    %996 = vmatprep.subr.bf16.mxu0 0
    %997 = vmatpush1.bf16.msra.mxu0 0
    %998 = vmatprep.subr.bf16.mxu0 0
    %999 = vmatpush1.bf16.msra.mxu0 0
    %1000 = vmatprep.subr.bf16.mxu0 0
    %1001 = vmatpush1.bf16.msra.mxu0 0
    %1002 = vmatprep.subr.bf16.mxu0 0
    %1003 = vmatpush1.bf16.msra.mxu0 0
    %1004 = vmatprep.subr.bf16.mxu0 0
    %1005 = vmatpush1.bf16.msra.mxu0 0
    %1006 = vmatprep.subr.bf16.mxu0 0
    %1007 = vmatpush1.bf16.msra.mxu0 0
    %1008 = vmatprep.subr.bf16.mxu0 0
    %1009 = vmatpush1.bf16.msra.mxu0 0
    %1010 = vmatprep.subr.bf16.mxu0 0
    %1011 = vmatpush1.bf16.msra.mxu0 0
    %1012 = vmatprep.subr.bf16.mxu0 0
    %1013 = vmatpush1.bf16.msra.mxu0 0
    %1014 = vmatprep.subr.bf16.mxu0 0
    %1015 = vmatpush1.bf16.msra.mxu0 0
    %1016 = vmatprep.subr.bf16.mxu0 0
    %1017 = vmatpush1.bf16.msra.mxu0 0
    %1018 = vmatprep.subr.bf16.mxu0 0
    %1019 = vmatpush1.bf16.msra.mxu0 0
    %1020 = vmatprep.mubr.bf16.mxu0 0
    %1021 = vmatmul.mubr.bf16.gmra.mrb[0].mxu0 %v986
    %v1022 = vpop.f32.mrb[0].mxu0
    %v1023 = vadd.f32 0.0, %v1022
    %v1024 = vpop.f32.mrb[0].mxu0
    %v1025 = vpop.f32.mrb[0].mxu0
    %v1026 = vpop.f32.mrb[0].mxu0
    %1027 = vdwg.mxu0
    %v1028 = vadd.f32 %v121, %v1023
    %v1029 = vxor.u32 %v1028, 2147483648
    %v1030 = vmul.f32 %v1029, 1.442695
    %v1031 = vpow.pop %v1030
    %v1032 = vadd.f32 %v1031, 1.0
    %v1033 = vrcp.pop %v1032
    %v1034 = vmul.f32 1.0, %v1033
    %v1035 = vtanh.pop %v1028
    %v1036 = vmul.f32 %v1034, %v969
    %1038 = vrot.lane.b32.xlu0 %v1035, 64
    %v1039 = vpop.permute.xlu0 %1038
    %v1041 = vmul.f32 %v1034, %v1039
    %1043 = vrot.lane.b32.xlu0 %v1041, 32
    %v1044 = vpop.permute.xlu0 %1043
    %v1046 = vadd.f32 %v1036, %v1044
    %v1047 = vtanh.pop %v1046
    %1049 = vrot.lane.b32.xlu0 %v1047, 64
    %v1050 = vpop.permute.xlu0 %1049
    %v1052 = vmul.f32 %v1034, %v1050
    %1053 = vst.msk [vmem:[#allocation8 + $0x10] sm:$0xff] %vm444, %v1052
    %v1054 = vpack.c.bf16 %v1052, %v1052
    %1056 = vrot.lane.b32.xlu0 %v1054, 32
    %v1057 = vpop.permute.xlu0 %1056
    %v1059 = vsel %vm82, %v1057, 0
    %1061 = vmatprep.subr.bf16.mxu0 0
    %1062 = vmatpush1.bf16.msra.mxu0 %v139
    %1063 = vmatprep.subr.bf16.mxu0 0
    %1064 = vmatpush1.bf16.msra.mxu0 %v140
    %1065 = vmatprep.subr.bf16.mxu0 0
    %1066 = vmatpush1.bf16.msra.mxu0 0
    %1067 = vmatprep.subr.bf16.mxu0 0
    %1068 = vmatpush1.bf16.msra.mxu0 0
    %1069 = vmatprep.subr.bf16.mxu0 0
    %1070 = vmatpush1.bf16.msra.mxu0 0
    %1071 = vmatprep.subr.bf16.mxu0 0
    %1072 = vmatpush1.bf16.msra.mxu0 0
    %1073 = vmatprep.subr.bf16.mxu0 0
    %1074 = vmatpush1.bf16.msra.mxu0 0
    %1075 = vmatprep.subr.bf16.mxu0 0
    %1076 = vmatpush1.bf16.msra.mxu0 0
    %1077 = vmatprep.subr.bf16.mxu0 0
    %1078 = vmatpush1.bf16.msra.mxu0 0
    %1079 = vmatprep.subr.bf16.mxu0 0
    %1080 = vmatpush1.bf16.msra.mxu0 0
    %1081 = vmatprep.subr.bf16.mxu0 0
    %1082 = vmatpush1.bf16.msra.mxu0 0
    %1083 = vmatprep.subr.bf16.mxu0 0
    %1084 = vmatpush1.bf16.msra.mxu0 0
    %1085 = vmatprep.subr.bf16.mxu0 0
    %1086 = vmatpush1.bf16.msra.mxu0 0
    %1087 = vmatprep.subr.bf16.mxu0 0
    %1088 = vmatpush1.bf16.msra.mxu0 0
    %1089 = vmatprep.subr.bf16.mxu0 0
    %1090 = vmatpush1.bf16.msra.mxu0 0
    %1091 = vmatprep.subr.bf16.mxu0 0
    %1092 = vmatpush1.bf16.msra.mxu0 0
    %1093 = vmatprep.mubr.bf16.mxu0 0
    %1094 = vmatmul.mubr.bf16.gmra.mrb[0].mxu0 %v1059
    %v1095 = vpop.f32.mrb[0].mxu0
    %v1096 = vadd.f32 0.0, %v1095
    %v1097 = vpop.f32.mrb[0].mxu0
    %v1098 = vpop.f32.mrb[0].mxu0
    %v1099 = vpop.f32.mrb[0].mxu0
    %1100 = vdwg.mxu0
    %v1101 = vadd.f32 %v121, %v1096
    %v1102 = vxor.u32 %v1101, 2147483648
    %v1103 = vmul.f32 %v1102, 1.442695
    %v1104 = vpow.pop %v1103
    %v1105 = vadd.f32 %v1104, 1.0
    %v1106 = vrcp.pop %v1105
    %v1107 = vmul.f32 1.0, %v1106
    %v1108 = vtanh.pop %v1101
    %v1109 = vmul.f32 %v1107, %v1046
    %1111 = vrot.lane.b32.xlu0 %v1108, 64
    %v1112 = vpop.permute.xlu0 %1111
    %v1114 = vmul.f32 %v1107, %v1112
    %1116 = vrot.lane.b32.xlu0 %v1114, 32
    %v1117 = vpop.permute.xlu0 %1116
    %v1119 = vadd.f32 %v1109, %v1117
    %v1120 = vtanh.pop %v1119
    %1122 = vrot.lane.b32.xlu0 %v1120, 64
    %v1123 = vpop.permute.xlu0 %1122
    %v1125 = vmul.f32 %v1107, %v1123
    %1127 = vrot.lane.b32.xlu0 %v1125, 32
    %v1128 = vpop.permute.xlu0 %1127
    %1130 = vst.msk [vmem:[#allocation8 + $0x18] sm:$0xff] %vm82, %v1128
    %v1131 = vpack.c.bf16 %v1125, %v1125
    %1133 = vrot.lane.b32.xlu0 %v1131, 32
    %v1134 = vpop.permute.xlu0 %1133
    %v1136 = vsel %vm82, %v1134, 0
    %1138 = vmatprep.subr.bf16.mxu0 0
    %1139 = vmatpush1.bf16.msra.mxu0 %v139
    %1140 = vmatprep.subr.bf16.mxu0 0
    %1141 = vmatpush1.bf16.msra.mxu0 %v140
    %1142 = vmatprep.subr.bf16.mxu0 0
    %1143 = vmatpush1.bf16.msra.mxu0 0
    %1144 = vmatprep.subr.bf16.mxu0 0
    %1145 = vmatpush1.bf16.msra.mxu0 0
    %1146 = vmatprep.subr.bf16.mxu0 0
    %1147 = vmatpush1.bf16.msra.mxu0 0
    %1148 = vmatprep.subr.bf16.mxu0 0
    %1149 = vmatpush1.bf16.msra.mxu0 0
    %1150 = vmatprep.subr.bf16.mxu0 0
    %1151 = vmatpush1.bf16.msra.mxu0 0
    %1152 = vmatprep.subr.bf16.mxu0 0
    %1153 = vmatpush1.bf16.msra.mxu0 0
    %1154 = vmatprep.subr.bf16.mxu0 0
    %1155 = vmatpush1.bf16.msra.mxu0 0
    %1156 = vmatprep.subr.bf16.mxu0 0
    %1157 = vmatpush1.bf16.msra.mxu0 0
    %1158 = vmatprep.subr.bf16.mxu0 0
    %1159 = vmatpush1.bf16.msra.mxu0 0
    %1160 = vmatprep.subr.bf16.mxu0 0
    %1161 = vmatpush1.bf16.msra.mxu0 0
    %1162 = vmatprep.subr.bf16.mxu0 0
    %1163 = vmatpush1.bf16.msra.mxu0 0
    %1164 = vmatprep.subr.bf16.mxu0 0
    %1165 = vmatpush1.bf16.msra.mxu0 0
    %1166 = vmatprep.subr.bf16.mxu0 0
    %1167 = vmatpush1.bf16.msra.mxu0 0
    %1168 = vmatprep.subr.bf16.mxu0 0
    %1169 = vmatpush1.bf16.msra.mxu0 0
    %1170 = vmatprep.mubr.bf16.mxu0 0
    %1171 = vmatmul.mubr.bf16.gmra.mrb[0].mxu0 %v1136
    %v1172 = vpop.f32.mrb[0].mxu0
    %v1173 = vadd.f32 0.0, %v1172
    %v1174 = vpop.f32.mrb[0].mxu0
    %v1175 = vpop.f32.mrb[0].mxu0
    %v1176 = vpop.f32.mrb[0].mxu0
    %1177 = vdwg.mxu0
    %v1178 = vadd.f32 %v121, %v1173
    %v1179 = vxor.u32 %v1178, 2147483648
    %v1180 = vmul.f32 %v1179, 1.442695
    %v1181 = vpow.pop %v1180
    %v1182 = vadd.f32 %v1181, 1.0
    %v1183 = vrcp.pop %v1182
    %v1184 = vmul.f32 1.0, %v1183
    %v1185 = vtanh.pop %v1178
    %v1186 = vmul.f32 %v1184, %v1119
    %1188 = vrot.lane.b32.xlu0 %v1185, 64
    %v1189 = vpop.permute.xlu0 %1188
    %v1191 = vmul.f32 %v1184, %v1189
    %1193 = vrot.lane.b32.xlu0 %v1191, 32
    %v1194 = vpop.permute.xlu0 %1193
    %v1196 = vadd.f32 %v1186, %v1194
    %v1197 = vtanh.pop %v1196
    %1199 = vrot.lane.b32.xlu0 %v1197, 64
    %v1200 = vpop.permute.xlu0 %1199
    %v1202 = vmul.f32 %v1184, %v1200
    %1204 = vrot.lane.b32.xlu0 %v1202, 64
    %v1205 = vpop.permute.xlu0 %1204
    %1207 = vst.msk [vmem:[#allocation8 + $0x18] sm:$0xff] %vm292, %v1205
    %v1208 = vpack.c.bf16 %v1202, %v1202
    %1210 = vrot.lane.b32.xlu0 %v1208, 32
    %v1211 = vpop.permute.xlu0 %1210
    %v1213 = vsel %vm82, %v1211, 0
    %1215 = vmatprep.subr.bf16.mxu0 0
    %1216 = vmatpush1.bf16.msra.mxu0 %v139
    %1217 = vmatprep.subr.bf16.mxu0 0
    %1218 = vmatpush1.bf16.msra.mxu0 %v140
    %1219 = vmatprep.subr.bf16.mxu0 0
    %1220 = vmatpush1.bf16.msra.mxu0 0
    %1221 = vmatprep.subr.bf16.mxu0 0
    %1222 = vmatpush1.bf16.msra.mxu0 0
    %1223 = vmatprep.subr.bf16.mxu0 0
    %1224 = vmatpush1.bf16.msra.mxu0 0
    %1225 = vmatprep.subr.bf16.mxu0 0
    %1226 = vmatpush1.bf16.msra.mxu0 0
    %1227 = vmatprep.subr.bf16.mxu0 0
    %1228 = vmatpush1.bf16.msra.mxu0 0
    %1229 = vmatprep.subr.bf16.mxu0 0
    %1230 = vmatpush1.bf16.msra.mxu0 0
    %1231 = vmatprep.subr.bf16.mxu0 0
    %1232 = vmatpush1.bf16.msra.mxu0 0
    %1233 = vmatprep.subr.bf16.mxu0 0
    %1234 = vmatpush1.bf16.msra.mxu0 0
    %1235 = vmatprep.subr.bf16.mxu0 0
    %1236 = vmatpush1.bf16.msra.mxu0 0
    %1237 = vmatprep.subr.bf16.mxu0 0
    %1238 = vmatpush1.bf16.msra.mxu0 0
    %1239 = vmatprep.subr.bf16.mxu0 0
    %1240 = vmatpush1.bf16.msra.mxu0 0
    %1241 = vmatprep.subr.bf16.mxu0 0
    %1242 = vmatpush1.bf16.msra.mxu0 0
    %1243 = vmatprep.subr.bf16.mxu0 0
    %1244 = vmatpush1.bf16.msra.mxu0 0
    %1245 = vmatprep.subr.bf16.mxu0 0
    %1246 = vmatpush1.bf16.msra.mxu0 0
    %1247 = vmatprep.mubr.bf16.mxu0 0
    %1248 = vmatmul.mubr.bf16.gmra.mrb[0].mxu0 %v1213
    %v1249 = vpop.f32.mrb[0].mxu0
    %v1250 = vadd.f32 0.0, %v1249
    %v1251 = vpop.f32.mrb[0].mxu0
    %v1252 = vpop.f32.mrb[0].mxu0
    %v1253 = vpop.f32.mrb[0].mxu0
    %1254 = vdwg.mxu0
    %v1255 = vadd.f32 %v121, %v1250
    %v1256 = vxor.u32 %v1255, 2147483648
    %v1257 = vmul.f32 %v1256, 1.442695
    %v1258 = vpow.pop %v1257
    %v1259 = vadd.f32 %v1258, 1.0
    %v1260 = vrcp.pop %v1259
    %v1261 = vmul.f32 1.0, %v1260
    %v1262 = vtanh.pop %v1255
    %v1263 = vmul.f32 %v1261, %v1196
    %1265 = vrot.lane.b32.xlu0 %v1262, 64
    %v1266 = vpop.permute.xlu0 %1265
    %v1268 = vmul.f32 %v1261, %v1266
    %1270 = vrot.lane.b32.xlu0 %v1268, 32
    %v1271 = vpop.permute.xlu0 %1270
    %v1273 = vadd.f32 %v1263, %v1271
    %v1274 = vtanh.pop %v1273
    %1276 = vrot.lane.b32.xlu0 %v1274, 64
    %v1277 = vpop.permute.xlu0 %1276
    %v1279 = vmul.f32 %v1261, %v1277
    %1281 = vrot.lane.b32.xlu0 %v1279, 96
    %v1282 = vpop.permute.xlu0 %1281
    %1284 = vst.msk [vmem:[#allocation8 + $0x18] sm:$0xff] %vm370, %v1282
    // Predicated region
    $region30: #{tpu_custom_call.1} parent=1 // pred_check
      _
    $region31: #{tpu_custom_call.1} parent=1 // pred_check_branch
      %1286 = sbr.rel (0) target = $region33
    $region32: #{tpu_custom_call.1} parent=1 // pred_region
      %s1288 = ssub.s32 512, 512
      %1289 = vsyncadd [#allocation4], %s1288
      %s1291 = sshll.u32 [#allocation8], 4
      %s1292 = int_to_ptr.vmem [resolvable:$true] %s1291
      %1294 = dma.vmem_to_hbm [thread:$0]  %s1292, 512, %s4, [#allocation4]
    $region33: #{tpu_custom_call.1} parent=1 // pred_fallthru
      _
    // Predicated region
    $region34: #{tpu_custom_call.1} parent=1 // pred_check
      _
    $region35: #{tpu_custom_call.1} parent=1 // pred_check_branch
      %1296 = sbr.rel (0) target = $region37
    $region36: #{tpu_custom_call.1} parent=1 // pred_region
      %1297 = dma.done [#allocation4], 512
    $region37: #{tpu_custom_call.1} parent=1 // pred_fallthru
      _
    %1298 = vsyncpa [#allocation3], 1
    %1299 = vsyncpa [#allocation6], 1
    %1300 = vsyncpa [#allocation4], 1

</llo_original>
